<compile_context>
chip_gen: v7x
topology: tpu7x:2x2x1
jax: 0.10.0
libtpu: 0.0.40
codegen_flags: <defaults>
</compile_context>

<pallas_src>
import math

import jax
import jax.numpy as jnp
from jax.experimental import pallas as pl
from jax.experimental.pallas import tpu as pltpu


# ---------------------------------------------------------------------------
# Kernel 1: conv-as-matmul (im2col patches @ reshaped weight), K-tiled MXU
# accumulation + per-row-tile partial sum / sum-of-squares for BN statistics.
# ---------------------------------------------------------------------------
def conv_stats_kernel(p_ref, w_ref, y_ref, sum_ref, sq_ref, acc_ref):
    k = pl.program_id(1)

    @pl.when(k == 0)
    def _():
        acc_ref[...] = jnp.zeros_like(acc_ref)

    # bf16 x bf16 -> f32 accumulate on the MXU.
    acc_ref[...] += jnp.dot(p_ref[...], w_ref[...],
                            preferred_element_type=jnp.float32)

    @pl.when(k == pl.num_programs(1) - 1)
    def _():
        acc = acc_ref[...]
        y_ref[...] = acc.astype(y_ref.dtype)
        # Per-M-tile partial statistics (reduced in the wrapper).  Keeping the
        # M grid axis free of a resident accumulator keeps it "parallel".
        sum_ref[...] = jnp.sum(acc, axis=0, keepdims=True)[None]
        sq_ref[...] = jnp.sum(acc * acc, axis=0, keepdims=True)[None]


# ---------------------------------------------------------------------------
# Kernel 2: batch-norm apply, y * scale + shift, on a lane-dense
# (M // r, r * Cout) view so stores are unmasked full-lane vst's.
# ---------------------------------------------------------------------------
def bn_apply_kernel(y_ref, scale_ref, shift_ref, o_ref):
    o_ref[...] = y_ref[...] * scale_ref[...] + shift_ref[...]


def _pick_tile(n, cap, align):
    """Largest t <= cap with t % align == 0 and n % t == 0, else n (full dim)."""
    t = min(n, cap)
    t = (t // align) * align
    while t >= align:
        if n % t == 0:
            return t
        t -= align
    return n


def conv_bn_forward(x_nchw, w, b, gamma, beta, *, padding, eps=1e-5,
                    compute_dtype=jnp.bfloat16):
    # A conv bias followed by training-mode BN cancels exactly in
    # (y - mean) * rstd, so it is dropped (saves a VPU add, one input stream
    # and its double-buffer).
    del b

    N, Cin, H, W = x_nchw.shape
    Cout, _, KH, KW = w.shape
    OH = H + 2 * padding - KH + 1
    OW = W + 2 * padding - KW + 1
    M = N * OH * OW
    K = KH * KW * Cin

    # ---- glue: NCHW -> NHWC, pad, im2col in bf16 (half the HBM bytes) ----
    # TODO(synk): replace the materialized im2col with implicit im2col
    # (Element-indexed shifted input windows as a reduction grid axis) to drop
    # the ~KH*KW x extra HBM traffic; allow_input_fusion below at least lets
    # XLA fuse the producer chain into the Pallas input pipeline where legal.
    x = jnp.transpose(x_nchw, (0, 2, 3, 1)).astype(compute_dtype)
    x_pad = jnp.pad(x, ((0, 0), (padding, padding), (padding, padding), (0, 0)))
    cols = []
    for kh in range(KH):
        for kw in range(KW):
            cols.append(x_pad[:, kh:kh + OH, kw:kw + OW, :])   # (N, OH, OW, Cin)
    patches = jnp.concatenate(cols, axis=-1).reshape(M, K)      # (M, K) bf16
    # weight (Cout,Cin,KH,KW) -> (KH,KW,Cin,Cout) -> (K, Cout), matching patches
    w_mat = jnp.transpose(w, (2, 3, 1, 0)).reshape(K, Cout).astype(compute_dtype)

    # ---- tiling: big row tiles, K tiled (128-aligned) when the layer is big ----
    tm = _pick_tile(M, 512, 8)      # output-row tile
    tk = _pick_tile(K, 512, 128)    # reduction tile (full K for small layers)
    n_m, n_k = M // tm, K // tk

    # ---- kernel 1: conv matmul + per-tile BN statistics ----
    y, psum, psq = pl.pallas_call(
        conv_stats_kernel,
        out_shape=(jax.ShapeDtypeStruct((M, Cout), jnp.float32),
                   jax.ShapeDtypeStruct((n_m, 1, Cout), jnp.float32),
                   jax.ShapeDtypeStruct((n_m, 1, Cout), jnp.float32)),
        grid_spec=pltpu.PrefetchScalarGridSpec(
            num_scalar_prefetch=0,
            grid=(n_m, n_k),                       # reduction axis last
            in_specs=[pl.BlockSpec((tm, tk), lambda i, k: (i, k)),
                      pl.BlockSpec((tk, Cout), lambda i, k: (k, 0))],
            out_specs=(pl.BlockSpec((tm, Cout), lambda i, k: (i, 0)),
                       pl.BlockSpec((1, 1, Cout), lambda i, k: (i, 0, 0)),
                       pl.BlockSpec((1, 1, Cout), lambda i, k: (i, 0, 0))),
            scratch_shapes=[pltpu.VMEM((tm, Cout), jnp.float32)]),
        compiler_params=pltpu.CompilerParams(
            dimension_semantics=("parallel", "arbitrary"),
            vmem_limit_bytes=48 * 1024 * 1024,     # headroom on v5e/v6e/v7x
            allow_input_fusion=[True, False]),
    )(patches, w_mat)

    # ---- tiny per-channel scalar math (training-mode BN, biased variance) ----
    ssum = jnp.sum(psum, axis=0)                   # (1, Cout)
    ssq = jnp.sum(psq, axis=0)                     # (1, Cout)
    mean = ssum / M
    var = jnp.maximum(ssq / M - mean * mean, 0.0)  # guard vs. cancellation
    rstd = jax.lax.rsqrt(var + eps)
    scale = gamma.reshape(1, Cout).astype(jnp.float32) * rstd
    shift = beta.reshape(1, Cout).astype(jnp.float32) - mean * scale

    # ---- kernel 2: BN apply on a lane-dense (M//r, r*Cout) view ----
    r = 128 // math.gcd(Cout, 128)                 # r*Cout is a multiple of 128
    if M % r != 0:
        r = 1
    M2, C2 = M // r, r * Cout
    y2 = y.reshape(M2, C2)                         # row-major merge: free reshape
    scale_t = jnp.tile(scale, (1, r))              # (1, C2)
    shift_t = jnp.tile(shift, (1, r))
    tm2 = _pick_tile(M2, 1024, 8)                  # big tiles: mem-bound pass

    yb = pl.pallas_call(
        bn_apply_kernel,
        out_shape=jax.ShapeDtypeStruct((M2, C2), jnp.float32),
        grid_spec=pltpu.PrefetchScalarGridSpec(
            num_scalar_prefetch=0,
            grid=(M2 // tm2,),
            in_specs=[pl.BlockSpec((tm2, C2), lambda i: (i, 0)),
                      pl.BlockSpec((1, C2), lambda i: (0, 0)),
                      pl.BlockSpec((1, C2), lambda i: (0, 0))],
            out_specs=pl.BlockSpec((tm2, C2), lambda i: (i, 0))),
        input_output_aliases={0: 0},               # update y in place
        compiler_params=pltpu.CompilerParams(
            dimension_semantics=("parallel",)),
    )(y2, scale_t, shift_t)

    # ---- glue: back to NCHW (module contract).  If the downstream consumer
    # can take NHWC, drop this transpose to save one full HBM pass. ----
    return jnp.transpose(yb.reshape(N, OH, OW, Cout), (0, 3, 1, 2))


if __name__ == "__main__":
    key = jax.random.PRNGKey(0)
    N, Cin, H, W = 2, 4, 16, 16
    Cout, ksz, pad = 8, 3, 1
    eps = 1e-5

    k1, k2, k3 = jax.random.split(key, 3)
    x = jax.random.normal(k1, (N, Cin, H, W), dtype=jnp.float32)

    # deterministic parameter init (PyTorch-like uniform fan-in bound)
    fan_in = Cin * ksz * ksz
    bound = (1.0 / fan_in) ** 0.5
    w = jax.random.uniform(k2, (Cout, Cin, ksz, ksz), jnp.float32, -bound, bound)
    b = jax.random.uniform(k3, (Cout,), jnp.float32, -bound, bound)
    gamma = jnp.ones((Cout,), jnp.float32)   # BatchNorm2d default weight
    beta = jnp.zeros((Cout,), jnp.float32)   # BatchNorm2d default bias

    out = jax.block_until_ready(
        conv_bn_forward(x, w, b, gamma, beta, padding=pad, eps=eps))

    # plain-JAX f32 reference: conv (+bias) followed by training-mode batch norm
    x_nhwc = jnp.transpose(x, (0, 2, 3, 1))
    w_hwio = jnp.transpose(w, (2, 3, 1, 0))
    y_ref = jax.lax.conv_general_dilated(
        x_nhwc, w_hwio, window_strides=(1, 1),
        padding=[(pad, pad), (pad, pad)],
        dimension_numbers=('NHWC', 'HWIO', 'NHWC'),
        precision=jax.lax.Precision.HIGHEST) + b
    mean = jnp.mean(y_ref, axis=(0, 1, 2))
    var = jnp.var(y_ref, axis=(0, 1, 2))
    y_bn = (y_ref - mean) / jnp.sqrt(var + eps) * gamma + beta
    ref = jnp.transpose(y_bn, (0, 3, 1, 2))

    assert out.shape == (N, Cout, H, W)
    max_err = float(jnp.max(jnp.abs(out - ref)))
    # bf16 MXU operands -> small relative error on the normalized output
    assert jnp.allclose(out, ref, rtol=2e-2, atol=2e-2), max_err
    print("KERNEL_OK")
</pallas_src>

<mosaic_0001>
module attributes {stable_mosaic.version = 11 : i64} {
  func.func @conv_stats_kernel(%arg0: i32, %arg1: i32, %arg2: memref<512x36xbf16, #tpu.memory_space<vmem>>, %arg3: memref<36x8xbf16, #tpu.memory_space<vmem>>, %arg4: memref<512x8xf32, #tpu.memory_space<vmem>>, %arg5: memref<1x1x8xf32, #tpu.memory_space<vmem>>, %arg6: memref<1x1x8xf32, #tpu.memory_space<vmem>>, %arg7: memref<512x8xf32, #tpu.memory_space<vmem>>) attributes {dimension_semantics = [#tpu.dimension_semantics<parallel>, #tpu.dimension_semantics<arbitrary>], iteration_bounds = array<i64: 1, 1>, scalar_prefetch = 0 : i64, scratch_operands = 1 : i64, tpu.core_type = #tpu.core_type<tc>, window_params = [{transform_indices = @transform_0, window_bounds = array<i64: 512, 36>}, {transform_indices = @transform_1, window_bounds = array<i64: 36, 8>}, {transform_indices = @transform_2, window_bounds = array<i64: 512, 8>}, {transform_indices = @transform_3, window_bounds = array<i64: 1, 1, 8>}, {transform_indices = @transform_4, window_bounds = array<i64: 1, 1, 8>}]} {
    %c0_i32 = arith.constant 0 : i32
    %0 = arith.cmpi eq, %arg1, %c0_i32 : i32
    %1 = arith.extui %0 : i1 to i32
    %c0_i32_0 = arith.constant 0 : i32
    %2 = arith.cmpi ne, %1, %c0_i32_0 : i32
    scf.if %2 {
      %cst_10 = arith.constant 0.000000e+00 : f32
      %12 = vector.broadcast %cst_10 : f32 to vector<512x8xf32>
      %c0_11 = arith.constant 0 : index
      %c0_12 = arith.constant 0 : index
      %13 = vector.load %arg7[%c0_11, %c0_12] : memref<512x8xf32, #tpu.memory_space<vmem>>, vector<512x8xf32>
      tpu.vector_store %arg7[%c0_11, %c0_12], %12 {strides = array<i32>} : memref<512x8xf32, #tpu.memory_space<vmem>>, vector<512x8xf32>,
    } else {
    }
    %c0 = arith.constant 0 : index
    %c0_1 = arith.constant 0 : index
    %3 = vector.load %arg7[%c0, %c0_1] : memref<512x8xf32, #tpu.memory_space<vmem>>, vector<512x8xf32>
    %c0_2 = arith.constant 0 : index
    %c0_3 = arith.constant 0 : index
    %4 = vector.load %arg2[%c0_2, %c0_3] : memref<512x36xbf16, #tpu.memory_space<vmem>>, vector<512x36xbf16>
    %c0_4 = arith.constant 0 : index
    %c0_5 = arith.constant 0 : index
    %5 = vector.load %arg3[%c0_4, %c0_5] : memref<36x8xbf16, #tpu.memory_space<vmem>>, vector<36x8xbf16>
    %cst = arith.constant dense<0.000000e+00> : vector<512x8xf32>
    %6 = tpu.matmul %4, %5, %cst {dimension_numbers = #tpu.dot_dimension_numbers<[1], [0], [0], [1], [0, 0, 1, 1], [], []>} : vector<512x36xbf16>, vector<36x8xbf16>, vector<512x8xf32> -> vector<512x8xf32>
    %7 = arith.addf %3, %6 : vector<512x8xf32>
    %c0_6 = arith.constant 0 : index
    %c0_7 = arith.constant 0 : index
    %8 = vector.load %arg7[%c0_6, %c0_7] : memref<512x8xf32, #tpu.memory_space<vmem>>, vector<512x8xf32>
    tpu.vector_store %arg7[%c0_6, %c0_7], %7 {strides = array<i32>} : memref<512x8xf32, #tpu.memory_space<vmem>>, vector<512x8xf32>,
    %c0_i32_8 = arith.constant 0 : i32
    %9 = arith.cmpi eq, %arg1, %c0_i32_8 : i32
    %10 = arith.extui %9 : i1 to i32
    %c0_i32_9 = arith.constant 0 : i32
    %11 = arith.cmpi ne, %10, %c0_i32_9 : i32
    scf.if %11 {
      %c0_10 = arith.constant 0 : index
      %c0_11 = arith.constant 0 : index
      %12 = vector.load %arg7[%c0_10, %c0_11] : memref<512x8xf32, #tpu.memory_space<vmem>>, vector<512x8xf32>
      %c0_12 = arith.constant 0 : index
      %c0_13 = arith.constant 0 : index
      %13 = vector.load %arg4[%c0_12, %c0_13] : memref<512x8xf32, #tpu.memory_space<vmem>>, vector<512x8xf32>
      tpu.vector_store %arg4[%c0_12, %c0_13], %12 {strides = array<i32>} : memref<512x8xf32, #tpu.memory_space<vmem>>, vector<512x8xf32>,
      %cst_14 = arith.constant dense<0.000000e+00> : vector<8xf32>
      %14 = vector.multi_reduction <add>, %12, %cst_14 [0] : vector<512x8xf32> to vector<8xf32>
      %15 = vector.shape_cast %14 : vector<8xf32> to vector<1x8xf32>
      %16 = vector.shape_cast %15 : vector<1x8xf32> to vector<1x1x8xf32>
      %c0_15 = arith.constant 0 : index
      %c0_16 = arith.constant 0 : index
      %c0_17 = arith.constant 0 : index
      %17 = vector.load %arg5[%c0_15, %c0_16, %c0_17] : memref<1x1x8xf32, #tpu.memory_space<vmem>>, vector<1x1x8xf32>
      tpu.vector_store %arg5[%c0_15, %c0_16, %c0_17], %16 {strides = array<i32>} : memref<1x1x8xf32, #tpu.memory_space<vmem>>, vector<1x1x8xf32>,
      %18 = arith.mulf %12, %12 : vector<512x8xf32>
      %cst_18 = arith.constant dense<0.000000e+00> : vector<8xf32>
      %19 = vector.multi_reduction <add>, %18, %cst_18 [0] : vector<512x8xf32> to vector<8xf32>
      %20 = vector.shape_cast %19 : vector<8xf32> to vector<1x8xf32>
      %21 = vector.shape_cast %20 : vector<1x8xf32> to vector<1x1x8xf32>
      %c0_19 = arith.constant 0 : index
      %c0_20 = arith.constant 0 : index
      %c0_21 = arith.constant 0 : index
      %22 = vector.load %arg6[%c0_19, %c0_20, %c0_21] : memref<1x1x8xf32, #tpu.memory_space<vmem>>, vector<1x1x8xf32>
      tpu.vector_store %arg6[%c0_19, %c0_20, %c0_21], %21 {strides = array<i32>} : memref<1x1x8xf32, #tpu.memory_space<vmem>>, vector<1x1x8xf32>,
    } else {
    }
    return
  }
  func.func @transform_0(%arg0: i32, %arg1: i32) -> (i32, i32) {
    %c0_i32 = arith.constant 0 : i32
    return %arg0, %arg1 : i32, i32
  }
  func.func @transform_1(%arg0: i32, %arg1: i32) -> (i32, i32) {
    %c0_i32 = arith.constant 0 : i32
    %c0_i32_0 = arith.constant 0 : i32
    return %arg1, %c0_i32 : i32, i32
  }
  func.func @transform_2(%arg0: i32, %arg1: i32) -> (i32, i32) {
    %c0_i32 = arith.constant 0 : i32
    %c0_i32_0 = arith.constant 0 : i32
    return %arg0, %c0_i32 : i32, i32
  }
  func.func @transform_3(%arg0: i32, %arg1: i32) -> (i32, i32, i32) {
    %c0_i32 = arith.constant 0 : i32
    %c0_i32_0 = arith.constant 0 : i32
    %c0_i32_1 = arith.constant 0 : i32
    return %arg0, %c0_i32, %c0_i32_0 : i32, i32, i32
  }
  func.func @transform_4(%arg0: i32, %arg1: i32) -> (i32, i32, i32) {
    %c0_i32 = arith.constant 0 : i32
    %c0_i32_0 = arith.constant 0 : i32
    %c0_i32_1 = arith.constant 0 : i32
    return %arg0, %c0_i32, %c0_i32_0 : i32, i32, i32
  }
}

</mosaic_0001>

<llo_original>
// kernel: tpu_custom_call.1
$region0: #{tpu_custom_call.1}
  #allocation0 [shape = 'u32[]', space=smem, size = 0x4, offset = 0x4, fixed_abs, tag = 'smem constant byte address 0x4 - core index']
  #allocation1 [shape = 'u32[144,128]{1,0:T(1,128)}', space=vmem, size = 0x12000, scoped, tag = 'internal scratch']
  #allocation2 [shape = 'f32[512,8]{1,0:T(8,128)}', space=vmem, size = 0x40000, scoped, tag = 'scratch operand']
  %s0 = inlined_call_operand.vmem [shape: bf16[512,36], index: 0, kind: input, shape index: {}]
  %s1 = inlined_call_operand.vmem [shape: bf16[36,8], index: 1, kind: input, shape index: {}]
  %s2 = inlined_call_operand.vmem [shape: f32[512,8], index: 2, kind: output, shape index: {0}]
  %s3 = inlined_call_operand.hbm [shape: f32[1,1,8], index: 3, kind: output, shape index: {1}]
  %s4 = inlined_call_operand.hbm [shape: f32[1,1,8], index: 4, kind: output, shape index: {2}]
  %5 = xla_tuple %s2, %s3, %s4
  %s6 = sld [smem:[#allocation0]]
  $region42: #{tpu_custom_call.1} parent=0
    _
  %s8 = ssub.s32 1, %s6
  %s9 = scalar_select 0, %s8, %s6
  $region1: #{tpu_custom_call.1} parent=0
    #allocation3 [shape = 'u8[512]{0}', space=vmem, size = 0x400, scoped, tag = 'output window, operand 1, single buffered']
    #allocation4 [shape = 's32[1]{0}', space=sflag, size = 0x4, scoped, tag = 'scoped memory for tpu_custom_call.1']
    #allocation5 [shape = 'u8[512]{0}', space=vmem, size = 0x400, scoped, tag = 'output window, operand 2, single buffered']
    #allocation6 [shape = 's32[1]{0}', space=sflag, size = 0x4, scoped, tag = 'scoped memory for tpu_custom_call.1']
    %10 = vsyncpa [#allocation4], 0
    %11 = vsyncpa [#allocation6], 0
    // Predicated region
    $region2: #{tpu_custom_call.1} parent=1 // pred_check
      _
    $region3: #{tpu_custom_call.1} parent=1 // pred_check_branch
      %13 = sbr.rel (0) target = $region5
    $region4: #{tpu_custom_call.1} parent=1 // pred_region
      _
    $region5: #{tpu_custom_call.1} parent=1 // pred_fallthru
      _
    // Predicated region
    $region6: #{tpu_custom_call.1} parent=1 // pred_check
      _
    $region7: #{tpu_custom_call.1} parent=1 // pred_check_branch
      %15 = sbr.rel (0) target = $region9
    $region8: #{tpu_custom_call.1} parent=1 // pred_region
      _
    $region9: #{tpu_custom_call.1} parent=1 // pred_fallthru
      _
    %p17 = scmp.eq.s32.totalorder 0, 0
    // Predicated region
    $region10: #{tpu_custom_call.1} parent=1 // pred_check
      %p18 = pneg %p17
    $region11: #{tpu_custom_call.1} parent=1 // pred_check_branch
      %20 = sbr.rel (%p18) target = $region13
    $region12: #{tpu_custom_call.1} parent=1 // pred_region
      %vm21 = vcmask 64512
      %22 = vst.msk [vmem:[#allocation2] sm:$0xff] %vm21, 0.0
      %23 = vst.msk [vmem:[#allocation2 + $0x8] sm:$0xff] %vm21, 0.0
      %24 = vst.msk [vmem:[#allocation2 + $0x10] sm:$0xff] %vm21, 0.0
      %25 = vst.msk [vmem:[#allocation2 + $0x18] sm:$0xff] %vm21, 0.0
      %26 = vst.msk [vmem:[#allocation2 + $0x20] sm:$0xff] %vm21, 0.0
      %27 = vst.msk [vmem:[#allocation2 + $0x28] sm:$0xff] %vm21, 0.0
      %28 = vst.msk [vmem:[#allocation2 + $0x30] sm:$0xff] %vm21, 0.0
      %29 = vst.msk [vmem:[#allocation2 + $0x38] sm:$0xff] %vm21, 0.0
      %30 = vst.msk [vmem:[#allocation2 + $0x40] sm:$0xff] %vm21, 0.0
      %31 = vst.msk [vmem:[#allocation2 + $0x48] sm:$0xff] %vm21, 0.0
      %32 = vst.msk [vmem:[#allocation2 + $0x50] sm:$0xff] %vm21, 0.0
      %33 = vst.msk [vmem:[#allocation2 + $0x58] sm:$0xff] %vm21, 0.0
      %34 = vst.msk [vmem:[#allocation2 + $0x60] sm:$0xff] %vm21, 0.0
      %35 = vst.msk [vmem:[#allocation2 + $0x68] sm:$0xff] %vm21, 0.0
      %36 = vst.msk [vmem:[#allocation2 + $0x70] sm:$0xff] %vm21, 0.0
      %37 = vst.msk [vmem:[#allocation2 + $0x78] sm:$0xff] %vm21, 0.0
      %38 = vst.msk [vmem:[#allocation2 + $0x80] sm:$0xff] %vm21, 0.0
      %39 = vst.msk [vmem:[#allocation2 + $0x88] sm:$0xff] %vm21, 0.0
      %40 = vst.msk [vmem:[#allocation2 + $0x90] sm:$0xff] %vm21, 0.0
      %41 = vst.msk [vmem:[#allocation2 + $0x98] sm:$0xff] %vm21, 0.0
      %42 = vst.msk [vmem:[#allocation2 + $0xa0] sm:$0xff] %vm21, 0.0
      %43 = vst.msk [vmem:[#allocation2 + $0xa8] sm:$0xff] %vm21, 0.0
      %44 = vst.msk [vmem:[#allocation2 + $0xb0] sm:$0xff] %vm21, 0.0
      %45 = vst.msk [vmem:[#allocation2 + $0xb8] sm:$0xff] %vm21, 0.0
      %46 = vst.msk [vmem:[#allocation2 + $0xc0] sm:$0xff] %vm21, 0.0
      %47 = vst.msk [vmem:[#allocation2 + $0xc8] sm:$0xff] %vm21, 0.0
      %48 = vst.msk [vmem:[#allocation2 + $0xd0] sm:$0xff] %vm21, 0.0
      %49 = vst.msk [vmem:[#allocation2 + $0xd8] sm:$0xff] %vm21, 0.0
      %50 = vst.msk [vmem:[#allocation2 + $0xe0] sm:$0xff] %vm21, 0.0
      %51 = vst.msk [vmem:[#allocation2 + $0xe8] sm:$0xff] %vm21, 0.0
      %52 = vst.msk [vmem:[#allocation2 + $0xf0] sm:$0xff] %vm21, 0.0
      %53 = vst.msk [vmem:[#allocation2 + $0xf8] sm:$0xff] %vm21, 0.0
      %54 = vst.msk [vmem:[#allocation2 + $0x100] sm:$0xff] %vm21, 0.0
      %55 = vst.msk [vmem:[#allocation2 + $0x108] sm:$0xff] %vm21, 0.0
      %56 = vst.msk [vmem:[#allocation2 + $0x110] sm:$0xff] %vm21, 0.0
      %57 = vst.msk [vmem:[#allocation2 + $0x118] sm:$0xff] %vm21, 0.0
      %58 = vst.msk [vmem:[#allocation2 + $0x120] sm:$0xff] %vm21, 0.0
      %59 = vst.msk [vmem:[#allocation2 + $0x128] sm:$0xff] %vm21, 0.0
      %60 = vst.msk [vmem:[#allocation2 + $0x130] sm:$0xff] %vm21, 0.0
      %61 = vst.msk [vmem:[#allocation2 + $0x138] sm:$0xff] %vm21, 0.0
      %62 = vst.msk [vmem:[#allocation2 + $0x140] sm:$0xff] %vm21, 0.0
      %63 = vst.msk [vmem:[#allocation2 + $0x148] sm:$0xff] %vm21, 0.0
      %64 = vst.msk [vmem:[#allocation2 + $0x150] sm:$0xff] %vm21, 0.0
      %65 = vst.msk [vmem:[#allocation2 + $0x158] sm:$0xff] %vm21, 0.0
      %66 = vst.msk [vmem:[#allocation2 + $0x160] sm:$0xff] %vm21, 0.0
      %67 = vst.msk [vmem:[#allocation2 + $0x168] sm:$0xff] %vm21, 0.0
      %68 = vst.msk [vmem:[#allocation2 + $0x170] sm:$0xff] %vm21, 0.0
      %69 = vst.msk [vmem:[#allocation2 + $0x178] sm:$0xff] %vm21, 0.0
      %70 = vst.msk [vmem:[#allocation2 + $0x180] sm:$0xff] %vm21, 0.0
      %71 = vst.msk [vmem:[#allocation2 + $0x188] sm:$0xff] %vm21, 0.0
      %72 = vst.msk [vmem:[#allocation2 + $0x190] sm:$0xff] %vm21, 0.0
      %73 = vst.msk [vmem:[#allocation2 + $0x198] sm:$0xff] %vm21, 0.0
      %74 = vst.msk [vmem:[#allocation2 + $0x1a0] sm:$0xff] %vm21, 0.0
      %75 = vst.msk [vmem:[#allocation2 + $0x1a8] sm:$0xff] %vm21, 0.0
      %76 = vst.msk [vmem:[#allocation2 + $0x1b0] sm:$0xff] %vm21, 0.0
      %77 = vst.msk [vmem:[#allocation2 + $0x1b8] sm:$0xff] %vm21, 0.0
      %78 = vst.msk [vmem:[#allocation2 + $0x1c0] sm:$0xff] %vm21, 0.0
      %79 = vst.msk [vmem:[#allocation2 + $0x1c8] sm:$0xff] %vm21, 0.0
      %80 = vst.msk [vmem:[#allocation2 + $0x1d0] sm:$0xff] %vm21, 0.0
      %81 = vst.msk [vmem:[#allocation2 + $0x1d8] sm:$0xff] %vm21, 0.0
      %82 = vst.msk [vmem:[#allocation2 + $0x1e0] sm:$0xff] %vm21, 0.0
      %83 = vst.msk [vmem:[#allocation2 + $0x1e8] sm:$0xff] %vm21, 0.0
      %84 = vst.msk [vmem:[#allocation2 + $0x1f0] sm:$0xff] %vm21, 0.0
      %85 = vst.msk [vmem:[#allocation2 + $0x1f8] sm:$0xff] %vm21, 0.0
    $region13: #{tpu_custom_call.1} parent=1 // pred_fallthru
      _
    %v86 = vld [vmem:[#allocation2] sm:$0xff]
    %v87 = vld [vmem:[#allocation2 + $0x8] sm:$0xff]
    %v88 = vld [vmem:[#allocation2 + $0x10] sm:$0xff]
    %v89 = vld [vmem:[#allocation2 + $0x18] sm:$0xff]
    %v90 = vld [vmem:[#allocation2 + $0x20] sm:$0xff]
    %v91 = vld [vmem:[#allocation2 + $0x28] sm:$0xff]
    %v92 = vld [vmem:[#allocation2 + $0x30] sm:$0xff]
    %v93 = vld [vmem:[#allocation2 + $0x38] sm:$0xff]
    %v94 = vld [vmem:[#allocation2 + $0x40] sm:$0xff]
    %v95 = vld [vmem:[#allocation2 + $0x48] sm:$0xff]
    %v96 = vld [vmem:[#allocation2 + $0x50] sm:$0xff]
    %v97 = vld [vmem:[#allocation2 + $0x58] sm:$0xff]
    %v98 = vld [vmem:[#allocation2 + $0x60] sm:$0xff]
    %v99 = vld [vmem:[#allocation2 + $0x68] sm:$0xff]
    %v100 = vld [vmem:[#allocation2 + $0x70] sm:$0xff]
    %v101 = vld [vmem:[#allocation2 + $0x78] sm:$0xff]
    %v102 = vld [vmem:[#allocation2 + $0x80] sm:$0xff]
    %v103 = vld [vmem:[#allocation2 + $0x88] sm:$0xff]
    %v104 = vld [vmem:[#allocation2 + $0x90] sm:$0xff]
    %v105 = vld [vmem:[#allocation2 + $0x98] sm:$0xff]
    %v106 = vld [vmem:[#allocation2 + $0xa0] sm:$0xff]
    %v107 = vld [vmem:[#allocation2 + $0xa8] sm:$0xff]
    %v108 = vld [vmem:[#allocation2 + $0xb0] sm:$0xff]
    %v109 = vld [vmem:[#allocation2 + $0xb8] sm:$0xff]
    %v110 = vld [vmem:[#allocation2 + $0xc0] sm:$0xff]
    %v111 = vld [vmem:[#allocation2 + $0xc8] sm:$0xff]
    %v112 = vld [vmem:[#allocation2 + $0xd0] sm:$0xff]
    %v113 = vld [vmem:[#allocation2 + $0xd8] sm:$0xff]
    %v114 = vld [vmem:[#allocation2 + $0xe0] sm:$0xff]
    %v115 = vld [vmem:[#allocation2 + $0xe8] sm:$0xff]
    %v116 = vld [vmem:[#allocation2 + $0xf0] sm:$0xff]
    %v117 = vld [vmem:[#allocation2 + $0xf8] sm:$0xff]
    %v118 = vld [vmem:[#allocation2 + $0x100] sm:$0xff]
    %v119 = vld [vmem:[#allocation2 + $0x108] sm:$0xff]
    %v120 = vld [vmem:[#allocation2 + $0x110] sm:$0xff]
    %v121 = vld [vmem:[#allocation2 + $0x118] sm:$0xff]
    %v122 = vld [vmem:[#allocation2 + $0x120] sm:$0xff]
    %v123 = vld [vmem:[#allocation2 + $0x128] sm:$0xff]
    %v124 = vld [vmem:[#allocation2 + $0x130] sm:$0xff]
    %v125 = vld [vmem:[#allocation2 + $0x138] sm:$0xff]
    %v126 = vld [vmem:[#allocation2 + $0x140] sm:$0xff]
    %v127 = vld [vmem:[#allocation2 + $0x148] sm:$0xff]
    %v128 = vld [vmem:[#allocation2 + $0x150] sm:$0xff]
    %v129 = vld [vmem:[#allocation2 + $0x158] sm:$0xff]
    %v130 = vld [vmem:[#allocation2 + $0x160] sm:$0xff]
    %v131 = vld [vmem:[#allocation2 + $0x168] sm:$0xff]
    %v132 = vld [vmem:[#allocation2 + $0x170] sm:$0xff]
    %v133 = vld [vmem:[#allocation2 + $0x178] sm:$0xff]
    %v134 = vld [vmem:[#allocation2 + $0x180] sm:$0xff]
    %v135 = vld [vmem:[#allocation2 + $0x188] sm:$0xff]
    %v136 = vld [vmem:[#allocation2 + $0x190] sm:$0xff]
    %v137 = vld [vmem:[#allocation2 + $0x198] sm:$0xff]
    %v138 = vld [vmem:[#allocation2 + $0x1a0] sm:$0xff]
    %v139 = vld [vmem:[#allocation2 + $0x1a8] sm:$0xff]
    %v140 = vld [vmem:[#allocation2 + $0x1b0] sm:$0xff]
    %v141 = vld [vmem:[#allocation2 + $0x1b8] sm:$0xff]
    %v142 = vld [vmem:[#allocation2 + $0x1c0] sm:$0xff]
    %v143 = vld [vmem:[#allocation2 + $0x1c8] sm:$0xff]
    %v144 = vld [vmem:[#allocation2 + $0x1d0] sm:$0xff]
    %v145 = vld [vmem:[#allocation2 + $0x1d8] sm:$0xff]
    %v146 = vld [vmem:[#allocation2 + $0x1e0] sm:$0xff]
    %v147 = vld [vmem:[#allocation2 + $0x1e8] sm:$0xff]
    %v148 = vld [vmem:[#allocation2 + $0x1f0] sm:$0xff]
    %v149 = vld [vmem:[#allocation2 + $0x1f8] sm:$0xff]
    %v150 = vld [vmem:[%s0] sm:$0xf]
    %v151 = vld [vmem:[%s0 + $0x4] sm:$0xf]
    %v152 = vld [vmem:[%s0 + $0x8] sm:$0xf]
    %v153 = vld [vmem:[%s0 + $0xc] sm:$0xf]
    %v154 = vld [vmem:[%s0 + $0x10] sm:$0xf]
    %v155 = vld [vmem:[%s0 + $0x14] sm:$0xf]
    %v156 = vld [vmem:[%s0 + $0x18] sm:$0xf]
    %v157 = vld [vmem:[%s0 + $0x1c] sm:$0xf]
    %v158 = vld [vmem:[%s0 + $0x20] sm:$0xf]
    %v159 = vld [vmem:[%s0 + $0x24] sm:$0xf]
    %v160 = vld [vmem:[%s0 + $0x28] sm:$0xf]
    %v161 = vld [vmem:[%s0 + $0x2c] sm:$0xf]
    %v162 = vld [vmem:[%s0 + $0x30] sm:$0xf]
    %v163 = vld [vmem:[%s0 + $0x34] sm:$0xf]
    %v164 = vld [vmem:[%s0 + $0x38] sm:$0xf]
    %v165 = vld [vmem:[%s0 + $0x3c] sm:$0xf]
    %v166 = vld [vmem:[%s0 + $0x40] sm:$0xf]
    %v167 = vld [vmem:[%s0 + $0x44] sm:$0xf]
    %v168 = vld [vmem:[%s0 + $0x48] sm:$0xf]
    %v169 = vld [vmem:[%s0 + $0x4c] sm:$0xf]
    %v170 = vld [vmem:[%s0 + $0x50] sm:$0xf]
    %v171 = vld [vmem:[%s0 + $0x54] sm:$0xf]
    %v172 = vld [vmem:[%s0 + $0x58] sm:$0xf]
    %v173 = vld [vmem:[%s0 + $0x5c] sm:$0xf]
    %v174 = vld [vmem:[%s0 + $0x60] sm:$0xf]
    %v175 = vld [vmem:[%s0 + $0x64] sm:$0xf]
    %v176 = vld [vmem:[%s0 + $0x68] sm:$0xf]
    %v177 = vld [vmem:[%s0 + $0x6c] sm:$0xf]
    %v178 = vld [vmem:[%s0 + $0x70] sm:$0xf]
    %v179 = vld [vmem:[%s0 + $0x74] sm:$0xf]
    %v180 = vld [vmem:[%s0 + $0x78] sm:$0xf]
    %v181 = vld [vmem:[%s0 + $0x7c] sm:$0xf]
    %v182 = vld [vmem:[%s0 + $0x80] sm:$0xf]
    %v183 = vld [vmem:[%s0 + $0x84] sm:$0xf]
    %v184 = vld [vmem:[%s0 + $0x88] sm:$0xf]
    %v185 = vld [vmem:[%s0 + $0x8c] sm:$0xf]
    %v186 = vld [vmem:[%s0 + $0x90] sm:$0xf]
    %v187 = vld [vmem:[%s0 + $0x94] sm:$0xf]
    %v188 = vld [vmem:[%s0 + $0x98] sm:$0xf]
    %v189 = vld [vmem:[%s0 + $0x9c] sm:$0xf]
    %v190 = vld [vmem:[%s0 + $0xa0] sm:$0xf]
    %v191 = vld [vmem:[%s0 + $0xa4] sm:$0xf]
    %v192 = vld [vmem:[%s0 + $0xa8] sm:$0xf]
    %v193 = vld [vmem:[%s0 + $0xac] sm:$0xf]
    %v194 = vld [vmem:[%s0 + $0xb0] sm:$0xf]
    %v195 = vld [vmem:[%s0 + $0xb4] sm:$0xf]
    %v196 = vld [vmem:[%s0 + $0xb8] sm:$0xf]
    %v197 = vld [vmem:[%s0 + $0xbc] sm:$0xf]
    %v198 = vld [vmem:[%s0 + $0xc0] sm:$0xf]
    %v199 = vld [vmem:[%s0 + $0xc4] sm:$0xf]
    %v200 = vld [vmem:[%s0 + $0xc8] sm:$0xf]
    %v201 = vld [vmem:[%s0 + $0xcc] sm:$0xf]
    %v202 = vld [vmem:[%s0 + $0xd0] sm:$0xf]
    %v203 = vld [vmem:[%s0 + $0xd4] sm:$0xf]
    %v204 = vld [vmem:[%s0 + $0xd8] sm:$0xf]
    %v205 = vld [vmem:[%s0 + $0xdc] sm:$0xf]
    %v206 = vld [vmem:[%s0 + $0xe0] sm:$0xf]
    %v207 = vld [vmem:[%s0 + $0xe4] sm:$0xf]
    %v208 = vld [vmem:[%s0 + $0xe8] sm:$0xf]
    %v209 = vld [vmem:[%s0 + $0xec] sm:$0xf]
    %v210 = vld [vmem:[%s0 + $0xf0] sm:$0xf]
    %v211 = vld [vmem:[%s0 + $0xf4] sm:$0xf]
    %v212 = vld [vmem:[%s0 + $0xf8] sm:$0xf]
    %v213 = vld [vmem:[%s0 + $0xfc] sm:$0xf]
    %v214 = vld [vmem:[%s1] sm:$0xf]
    %v215 = vld [vmem:[%s1 + $0x4] sm:$0xf]
    %v216 = vld [vmem:[%s1 + $0x8] sm:$0xf]
    %v217 = vld [vmem:[%s1 + $0xc] sm:$0xf]
    %v218 = vld [vmem:[%s1 + $0x10] sm:$0x3]
    %v283 = vunpack.c.l.b16 %v150
    %v284 = vunpack.c.l.b16 %v151
    %v285 = vunpack.c.l.b16 %v152
    %v286 = vunpack.c.l.b16 %v153
    %v287 = vunpack.c.l.b16 %v154
    %v288 = vunpack.c.l.b16 %v155
    %v289 = vunpack.c.l.b16 %v156
    %v290 = vunpack.c.l.b16 %v157
    %v291 = vunpack.c.l.b16 %v158
    %v292 = vunpack.c.l.b16 %v159
    %v293 = vunpack.c.l.b16 %v160
    %v294 = vunpack.c.l.b16 %v161
    %v295 = vunpack.c.l.b16 %v162
    %v296 = vunpack.c.l.b16 %v163
    %v297 = vunpack.c.l.b16 %v164
    %v298 = vunpack.c.l.b16 %v165
    %v299 = vunpack.c.l.b16 %v166
    %v300 = vunpack.c.l.b16 %v167
    %v301 = vunpack.c.l.b16 %v168
    %v302 = vunpack.c.l.b16 %v169
    %v303 = vunpack.c.l.b16 %v170
    %v304 = vunpack.c.l.b16 %v171
    %v305 = vunpack.c.l.b16 %v172
    %v306 = vunpack.c.l.b16 %v173
    %v307 = vunpack.c.l.b16 %v174
    %v308 = vunpack.c.l.b16 %v175
    %v309 = vunpack.c.l.b16 %v176
    %v310 = vunpack.c.l.b16 %v177
    %v311 = vunpack.c.l.b16 %v178
    %v312 = vunpack.c.l.b16 %v179
    %v313 = vunpack.c.l.b16 %v180
    %v314 = vunpack.c.l.b16 %v181
    %v315 = vunpack.c.l.b16 %v182
    %v316 = vunpack.c.l.b16 %v183
    %v317 = vunpack.c.l.b16 %v184
    %v318 = vunpack.c.l.b16 %v185
    %v319 = vunpack.c.l.b16 %v186
    %v320 = vunpack.c.l.b16 %v187
    %v321 = vunpack.c.l.b16 %v188
    %v322 = vunpack.c.l.b16 %v189
    %v323 = vunpack.c.l.b16 %v190
    %v324 = vunpack.c.l.b16 %v191
    %v325 = vunpack.c.l.b16 %v192
    %v326 = vunpack.c.l.b16 %v193
    %v327 = vunpack.c.l.b16 %v194
    %v328 = vunpack.c.l.b16 %v195
    %v329 = vunpack.c.l.b16 %v196
    %v330 = vunpack.c.l.b16 %v197
    %v331 = vunpack.c.l.b16 %v198
    %v332 = vunpack.c.l.b16 %v199
    %v333 = vunpack.c.l.b16 %v200
    %v334 = vunpack.c.l.b16 %v201
    %v335 = vunpack.c.l.b16 %v202
    %v336 = vunpack.c.l.b16 %v203
    %v337 = vunpack.c.l.b16 %v204
    %v338 = vunpack.c.l.b16 %v205
    %v339 = vunpack.c.l.b16 %v206
    %v340 = vunpack.c.l.b16 %v207
    %v341 = vunpack.c.l.b16 %v208
    %v342 = vunpack.c.l.b16 %v209
    %v343 = vunpack.c.l.b16 %v210
    %v344 = vunpack.c.l.b16 %v211
    %v345 = vunpack.c.l.b16 %v212
    %v346 = vunpack.c.l.b16 %v213
    %v347 = vpack.c.b16 %v284, %v283
    %v348 = vpack.c.b16 %v286, %v285
    %v349 = vpack.c.b16 %v288, %v287
    %v350 = vpack.c.b16 %v290, %v289
    %v351 = vpack.c.b16 %v292, %v291
    %v352 = vpack.c.b16 %v294, %v293
    %v353 = vpack.c.b16 %v296, %v295
    %v354 = vpack.c.b16 %v298, %v297
    %v355 = vpack.c.b16 %v300, %v299
    %v356 = vpack.c.b16 %v302, %v301
    %v357 = vpack.c.b16 %v304, %v303
    %v358 = vpack.c.b16 %v306, %v305
    %v359 = vpack.c.b16 %v308, %v307
    %v360 = vpack.c.b16 %v310, %v309
    %v361 = vpack.c.b16 %v312, %v311
    %v362 = vpack.c.b16 %v314, %v313
    %v363 = vpack.c.b16 %v316, %v315
    %v364 = vpack.c.b16 %v318, %v317
    %v365 = vpack.c.b16 %v320, %v319
    %v366 = vpack.c.b16 %v322, %v321
    %v367 = vpack.c.b16 %v324, %v323
    %v368 = vpack.c.b16 %v326, %v325
    %v369 = vpack.c.b16 %v328, %v327
    %v370 = vpack.c.b16 %v330, %v329
    %v371 = vpack.c.b16 %v332, %v331
    %v372 = vpack.c.b16 %v334, %v333
    %v373 = vpack.c.b16 %v336, %v335
    %v374 = vpack.c.b16 %v338, %v337
    %v375 = vpack.c.b16 %v340, %v339
    %v376 = vpack.c.b16 %v342, %v341
    %v377 = vpack.c.b16 %v344, %v343
    %v378 = vpack.c.b16 %v346, %v345
    %v384 = vunpack.c.l.b16 %v214
    %v385 = vunpack.c.l.b16 %v215
    %v386 = vunpack.c.l.b16 %v216
    %v387 = vunpack.c.l.b16 %v217
    %v388 = vunpack.c.l.b16 %v218
    %v389 = vpack.c.b16 %v385, %v384
    %v390 = vpack.c.b16 %v387, %v386
    %v391 = vpack.c.b16 %v388, %v388
    %vm394 = vcmask 293888
    %v396 = vsel %vm394, %v347, 0
    %v399 = vsel %vm394, %v348, 0
    %v402 = vsel %vm394, %v349, 0
    %v405 = vsel %vm394, %v350, 0
    %v408 = vsel %vm394, %v351, 0
    %v411 = vsel %vm394, %v352, 0
    %v414 = vsel %vm394, %v353, 0
    %v417 = vsel %vm394, %v354, 0
    %v420 = vsel %vm394, %v355, 0
    %v423 = vsel %vm394, %v356, 0
    %v426 = vsel %vm394, %v357, 0
    %v429 = vsel %vm394, %v358, 0
    %v432 = vsel %vm394, %v359, 0
    %v435 = vsel %vm394, %v360, 0
    %v438 = vsel %vm394, %v361, 0
    %v441 = vsel %vm394, %v362, 0
    %v444 = vsel %vm394, %v363, 0
    %v447 = vsel %vm394, %v364, 0
    %v450 = vsel %vm394, %v365, 0
    %v453 = vsel %vm394, %v366, 0
    %v456 = vsel %vm394, %v367, 0
    %v459 = vsel %vm394, %v368, 0
    %v462 = vsel %vm394, %v369, 0
    %v465 = vsel %vm394, %v370, 0
    %v468 = vsel %vm394, %v371, 0
    %v471 = vsel %vm394, %v372, 0
    %v474 = vsel %vm394, %v373, 0
    %v477 = vsel %vm394, %v374, 0
    %v480 = vsel %vm394, %v375, 0
    %v483 = vsel %vm394, %v376, 0
    %v486 = vsel %vm394, %v377, 0
    %v489 = vsel %vm394, %v378, 0
    %vm491 = vcmask 1041408
    %v493 = vsel %vm491, %v391, 0
    %495 = vmatprep.subr.bf16.mxu0 0
    %496 = vmatpush1.bf16.msra.mxu0 %v389
    %497 = vmatprep.subr.bf16.mxu0 0
    %498 = vmatpush1.bf16.msra.mxu0 %v390
    %499 = vmatprep.subr.bf16.mxu0 0
    %500 = vmatpush1.bf16.msra.mxu0 %v493
    %501 = vmatprep.subr.bf16.mxu0 0
    %502 = vmatpush1.bf16.msra.mxu0 0
    %503 = vmatprep.subr.bf16.mxu0 0
    %504 = vmatpush1.bf16.msra.mxu0 0
    %505 = vmatprep.subr.bf16.mxu0 0
    %506 = vmatpush1.bf16.msra.mxu0 0
    %507 = vmatprep.subr.bf16.mxu0 0
    %508 = vmatpush1.bf16.msra.mxu0 0
    %509 = vmatprep.subr.bf16.mxu0 0
    %510 = vmatpush1.bf16.msra.mxu0 0
    %511 = vmatprep.subr.bf16.mxu0 0
    %512 = vmatpush1.bf16.msra.mxu0 0
    %513 = vmatprep.subr.bf16.mxu0 0
    %514 = vmatpush1.bf16.msra.mxu0 0
    %515 = vmatprep.subr.bf16.mxu0 0
    %516 = vmatpush1.bf16.msra.mxu0 0
    %517 = vmatprep.subr.bf16.mxu0 0
    %518 = vmatpush1.bf16.msra.mxu0 0
    %519 = vmatprep.subr.bf16.mxu0 0
    %520 = vmatpush1.bf16.msra.mxu0 0
    %521 = vmatprep.subr.bf16.mxu0 0
    %522 = vmatpush1.bf16.msra.mxu0 0
    %523 = vmatprep.subr.bf16.mxu0 0
    %524 = vmatpush1.bf16.msra.mxu0 0
    %525 = vmatprep.subr.bf16.mxu0 0
    %526 = vmatpush1.bf16.msra.mxu0 0
    %527 = vmatprep.mubr.bf16.mxu0 0
    %528 = vmatmul.mubr.bf16.gmra.mrb[0].mxu0 %v396
    %v529 = vpop.f32.mrb[0].mxu0
    %v530 = vadd.f32 0.0, %v529
    %v531 = vpop.f32.mrb[0].mxu0
    %v532 = vpop.f32.mrb[0].mxu0
    %v533 = vadd.f32 0.0, %v532
    %v534 = vpop.f32.mrb[0].mxu0
    %535 = vmatprep.mubr.bf16.mxu0 0
    %536 = vmatmul.mubr.bf16.gmra.mrb[0].mxu0 %v399
    %v537 = vpop.f32.mrb[0].mxu0
    %v538 = vadd.f32 0.0, %v537
    %v539 = vpop.f32.mrb[0].mxu0
    %v540 = vpop.f32.mrb[0].mxu0
    %v541 = vadd.f32 0.0, %v540
    %v542 = vpop.f32.mrb[0].mxu0
    %543 = vmatprep.mubr.bf16.mxu0 0
    %544 = vmatmul.mubr.bf16.gmra.mrb[0].mxu0 %v402
    %v545 = vpop.f32.mrb[0].mxu0
    %v546 = vadd.f32 0.0, %v545
    %v547 = vpop.f32.mrb[0].mxu0
    %v548 = vpop.f32.mrb[0].mxu0
    %v549 = vadd.f32 0.0, %v548
    %v550 = vpop.f32.mrb[0].mxu0
    %551 = vmatprep.mubr.bf16.mxu0 0
    %552 = vmatmul.mubr.bf16.gmra.mrb[0].mxu0 %v405
    %v553 = vpop.f32.mrb[0].mxu0
    %v554 = vadd.f32 0.0, %v553
    %v555 = vpop.f32.mrb[0].mxu0
    %v556 = vpop.f32.mrb[0].mxu0
    %v557 = vadd.f32 0.0, %v556
    %v558 = vpop.f32.mrb[0].mxu0
    %559 = vmatprep.mubr.bf16.mxu0 0
    %560 = vmatmul.mubr.bf16.gmra.mrb[0].mxu0 %v408
    %v561 = vpop.f32.mrb[0].mxu0
    %v562 = vadd.f32 0.0, %v561
    %v563 = vpop.f32.mrb[0].mxu0
    %v564 = vpop.f32.mrb[0].mxu0
    %v565 = vadd.f32 0.0, %v564
    %v566 = vpop.f32.mrb[0].mxu0
    %567 = vmatprep.mubr.bf16.mxu0 0
    %568 = vmatmul.mubr.bf16.gmra.mrb[0].mxu0 %v411
    %v569 = vpop.f32.mrb[0].mxu0
    %v570 = vadd.f32 0.0, %v569
    %v571 = vpop.f32.mrb[0].mxu0
    %v572 = vpop.f32.mrb[0].mxu0
    %v573 = vadd.f32 0.0, %v572
    %v574 = vpop.f32.mrb[0].mxu0
    %575 = vmatprep.mubr.bf16.mxu0 0
    %576 = vmatmul.mubr.bf16.gmra.mrb[0].mxu0 %v414
    %v577 = vpop.f32.mrb[0].mxu0
    %v578 = vadd.f32 0.0, %v577
    %v579 = vpop.f32.mrb[0].mxu0
    %v580 = vpop.f32.mrb[0].mxu0
    %v581 = vadd.f32 0.0, %v580
    %v582 = vpop.f32.mrb[0].mxu0
    %583 = vmatprep.mubr.bf16.mxu0 0
    %584 = vmatmul.mubr.bf16.gmra.mrb[0].mxu0 %v417
    %v585 = vpop.f32.mrb[0].mxu0
    %v586 = vadd.f32 0.0, %v585
    %v587 = vpop.f32.mrb[0].mxu0
    %v588 = vpop.f32.mrb[0].mxu0
    %v589 = vadd.f32 0.0, %v588
    %v590 = vpop.f32.mrb[0].mxu0
    %591 = vmatprep.mubr.bf16.mxu0 0
    %592 = vmatmul.mubr.bf16.gmra.mrb[0].mxu0 %v420
    %v593 = vpop.f32.mrb[0].mxu0
    %v594 = vadd.f32 0.0, %v593
    %v595 = vpop.f32.mrb[0].mxu0
    %v596 = vpop.f32.mrb[0].mxu0
    %v597 = vadd.f32 0.0, %v596
    %v598 = vpop.f32.mrb[0].mxu0
    %599 = vmatprep.mubr.bf16.mxu0 0
    %600 = vmatmul.mubr.bf16.gmra.mrb[0].mxu0 %v423
    %v601 = vpop.f32.mrb[0].mxu0
    %v602 = vadd.f32 0.0, %v601
    %v603 = vpop.f32.mrb[0].mxu0
    %v604 = vpop.f32.mrb[0].mxu0
    %v605 = vadd.f32 0.0, %v604
    %v606 = vpop.f32.mrb[0].mxu0
    %607 = vmatprep.mubr.bf16.mxu0 0
    %608 = vmatmul.mubr.bf16.gmra.mrb[0].mxu0 %v426
    %v609 = vpop.f32.mrb[0].mxu0
    %v610 = vadd.f32 0.0, %v609
    %v611 = vpop.f32.mrb[0].mxu0
    %v612 = vpop.f32.mrb[0].mxu0
    %v613 = vadd.f32 0.0, %v612
    %v614 = vpop.f32.mrb[0].mxu0
    %615 = vmatprep.mubr.bf16.mxu0 0
    %616 = vmatmul.mubr.bf16.gmra.mrb[0].mxu0 %v429
    %v617 = vpop.f32.mrb[0].mxu0
    %v618 = vadd.f32 0.0, %v617
    %v619 = vpop.f32.mrb[0].mxu0
    %v620 = vpop.f32.mrb[0].mxu0
    %v621 = vadd.f32 0.0, %v620
    %v622 = vpop.f32.mrb[0].mxu0
    %623 = vmatprep.mubr.bf16.mxu0 0
    %624 = vmatmul.mubr.bf16.gmra.mrb[0].mxu0 %v432
    %v625 = vpop.f32.mrb[0].mxu0
    %v626 = vadd.f32 0.0, %v625
    %v627 = vpop.f32.mrb[0].mxu0
    %v628 = vpop.f32.mrb[0].mxu0
    %v629 = vadd.f32 0.0, %v628
    %v630 = vpop.f32.mrb[0].mxu0
    %631 = vmatprep.mubr.bf16.mxu0 0
    %632 = vmatmul.mubr.bf16.gmra.mrb[0].mxu0 %v435
    %v633 = vpop.f32.mrb[0].mxu0
    %v634 = vadd.f32 0.0, %v633
    %v635 = vpop.f32.mrb[0].mxu0
    %v636 = vpop.f32.mrb[0].mxu0
    %v637 = vadd.f32 0.0, %v636
    %v638 = vpop.f32.mrb[0].mxu0
    %639 = vmatprep.mubr.bf16.mxu0 0
    %640 = vmatmul.mubr.bf16.gmra.mrb[0].mxu0 %v438
    %v641 = vpop.f32.mrb[0].mxu0
    %v642 = vadd.f32 0.0, %v641
    %v643 = vpop.f32.mrb[0].mxu0
    %v644 = vpop.f32.mrb[0].mxu0
    %v645 = vadd.f32 0.0, %v644
    %v646 = vpop.f32.mrb[0].mxu0
    %647 = vmatprep.mubr.bf16.mxu0 0
    %648 = vmatmul.mubr.bf16.gmra.mrb[0].mxu0 %v441
    %v649 = vpop.f32.mrb[0].mxu0
    %v650 = vadd.f32 0.0, %v649
    %v651 = vpop.f32.mrb[0].mxu0
    %v652 = vpop.f32.mrb[0].mxu0
    %v653 = vadd.f32 0.0, %v652
    %v654 = vpop.f32.mrb[0].mxu0
    %655 = vmatprep.mubr.bf16.mxu0 0
    %656 = vmatmul.mubr.bf16.gmra.mrb[0].mxu0 %v444
    %v657 = vpop.f32.mrb[0].mxu0
    %v658 = vadd.f32 0.0, %v657
    %v659 = vpop.f32.mrb[0].mxu0
    %v660 = vpop.f32.mrb[0].mxu0
    %v661 = vadd.f32 0.0, %v660
    %v662 = vpop.f32.mrb[0].mxu0
    %663 = vmatprep.mubr.bf16.mxu0 0
    %664 = vmatmul.mubr.bf16.gmra.mrb[0].mxu0 %v447
    %v665 = vpop.f32.mrb[0].mxu0
    %v666 = vadd.f32 0.0, %v665
    %v667 = vpop.f32.mrb[0].mxu0
    %v668 = vpop.f32.mrb[0].mxu0
    %v669 = vadd.f32 0.0, %v668
    %v670 = vpop.f32.mrb[0].mxu0
    %671 = vmatprep.mubr.bf16.mxu0 0
    %672 = vmatmul.mubr.bf16.gmra.mrb[0].mxu0 %v450
    %v673 = vpop.f32.mrb[0].mxu0
    %v674 = vadd.f32 0.0, %v673
    %v675 = vpop.f32.mrb[0].mxu0
    %v676 = vpop.f32.mrb[0].mxu0
    %v677 = vadd.f32 0.0, %v676
    %v678 = vpop.f32.mrb[0].mxu0
    %679 = vmatprep.mubr.bf16.mxu0 0
    %680 = vmatmul.mubr.bf16.gmra.mrb[0].mxu0 %v453
    %v681 = vpop.f32.mrb[0].mxu0
    %v682 = vadd.f32 0.0, %v681
    %v683 = vpop.f32.mrb[0].mxu0
    %v684 = vpop.f32.mrb[0].mxu0
    %v685 = vadd.f32 0.0, %v684
    %v686 = vpop.f32.mrb[0].mxu0
    %687 = vmatprep.mubr.bf16.mxu0 0
    %688 = vmatmul.mubr.bf16.gmra.mrb[0].mxu0 %v456
    %v689 = vpop.f32.mrb[0].mxu0
    %v690 = vadd.f32 0.0, %v689
    %v691 = vpop.f32.mrb[0].mxu0
    %v692 = vpop.f32.mrb[0].mxu0
    %v693 = vadd.f32 0.0, %v692
    %v694 = vpop.f32.mrb[0].mxu0
    %695 = vmatprep.mubr.bf16.mxu0 0
    %696 = vmatmul.mubr.bf16.gmra.mrb[0].mxu0 %v459
    %v697 = vpop.f32.mrb[0].mxu0
    %v698 = vadd.f32 0.0, %v697
    %v699 = vpop.f32.mrb[0].mxu0
    %v700 = vpop.f32.mrb[0].mxu0
    %v701 = vadd.f32 0.0, %v700
    %v702 = vpop.f32.mrb[0].mxu0
    %703 = vmatprep.mubr.bf16.mxu0 0
    %704 = vmatmul.mubr.bf16.gmra.mrb[0].mxu0 %v462
    %v705 = vpop.f32.mrb[0].mxu0
    %v706 = vadd.f32 0.0, %v705
    %v707 = vpop.f32.mrb[0].mxu0
    %v708 = vpop.f32.mrb[0].mxu0
    %v709 = vadd.f32 0.0, %v708
    %v710 = vpop.f32.mrb[0].mxu0
    %711 = vmatprep.mubr.bf16.mxu0 0
    %712 = vmatmul.mubr.bf16.gmra.mrb[0].mxu0 %v465
    %v713 = vpop.f32.mrb[0].mxu0
    %v714 = vadd.f32 0.0, %v713
    %v715 = vpop.f32.mrb[0].mxu0
    %v716 = vpop.f32.mrb[0].mxu0
    %v717 = vadd.f32 0.0, %v716
    %v718 = vpop.f32.mrb[0].mxu0
    %719 = vmatprep.mubr.bf16.mxu0 0
    %720 = vmatmul.mubr.bf16.gmra.mrb[0].mxu0 %v468
    %v721 = vpop.f32.mrb[0].mxu0
    %v722 = vadd.f32 0.0, %v721
    %v723 = vpop.f32.mrb[0].mxu0
    %v724 = vpop.f32.mrb[0].mxu0
    %v725 = vadd.f32 0.0, %v724
    %v726 = vpop.f32.mrb[0].mxu0
    %727 = vmatprep.mubr.bf16.mxu0 0
    %728 = vmatmul.mubr.bf16.gmra.mrb[0].mxu0 %v471
    %v729 = vpop.f32.mrb[0].mxu0
    %v730 = vadd.f32 0.0, %v729
    %v731 = vpop.f32.mrb[0].mxu0
    %v732 = vpop.f32.mrb[0].mxu0
    %v733 = vadd.f32 0.0, %v732
    %v734 = vpop.f32.mrb[0].mxu0
    %735 = vmatprep.mubr.bf16.mxu0 0
    %736 = vmatmul.mubr.bf16.gmra.mrb[0].mxu0 %v474
    %v737 = vpop.f32.mrb[0].mxu0
    %v738 = vadd.f32 0.0, %v737
    %v739 = vpop.f32.mrb[0].mxu0
    %v740 = vpop.f32.mrb[0].mxu0
    %v741 = vadd.f32 0.0, %v740
    %v742 = vpop.f32.mrb[0].mxu0
    %743 = vmatprep.mubr.bf16.mxu0 0
    %744 = vmatmul.mubr.bf16.gmra.mrb[0].mxu0 %v477
    %v745 = vpop.f32.mrb[0].mxu0
    %v746 = vadd.f32 0.0, %v745
    %v747 = vpop.f32.mrb[0].mxu0
    %v748 = vpop.f32.mrb[0].mxu0
    %v749 = vadd.f32 0.0, %v748
    %v750 = vpop.f32.mrb[0].mxu0
    %751 = vmatprep.mubr.bf16.mxu0 0
    %752 = vmatmul.mubr.bf16.gmra.mrb[0].mxu0 %v480
    %v753 = vpop.f32.mrb[0].mxu0
    %v754 = vadd.f32 0.0, %v753
    %v755 = vpop.f32.mrb[0].mxu0
    %v756 = vpop.f32.mrb[0].mxu0
    %v757 = vadd.f32 0.0, %v756
    %v758 = vpop.f32.mrb[0].mxu0
    %759 = vmatprep.mubr.bf16.mxu0 0
    %760 = vmatmul.mubr.bf16.gmra.mrb[0].mxu0 %v483
    %v761 = vpop.f32.mrb[0].mxu0
    %v762 = vadd.f32 0.0, %v761
    %v763 = vpop.f32.mrb[0].mxu0
    %v764 = vpop.f32.mrb[0].mxu0
    %v765 = vadd.f32 0.0, %v764
    %v766 = vpop.f32.mrb[0].mxu0
    %767 = vmatprep.mubr.bf16.mxu0 0
    %768 = vmatmul.mubr.bf16.gmra.mrb[0].mxu0 %v486
    %v769 = vpop.f32.mrb[0].mxu0
    %v770 = vadd.f32 0.0, %v769
    %v771 = vpop.f32.mrb[0].mxu0
    %v772 = vpop.f32.mrb[0].mxu0
    %v773 = vadd.f32 0.0, %v772
    %v774 = vpop.f32.mrb[0].mxu0
    %775 = vmatprep.mubr.bf16.mxu0 0
    %776 = vmatmul.mubr.bf16.gmra.mrb[0].mxu0 %v489
    %v777 = vpop.f32.mrb[0].mxu0
    %v778 = vadd.f32 0.0, %v777
    %v779 = vpop.f32.mrb[0].mxu0
    %v780 = vpop.f32.mrb[0].mxu0
    %v781 = vadd.f32 0.0, %v780
    %v782 = vpop.f32.mrb[0].mxu0
    %783 = vdwg.mxu0
    %v784 = vadd.f32 %v86, %v530
    %v785 = vadd.f32 %v87, %v533
    %v786 = vadd.f32 %v88, %v538
    %v787 = vadd.f32 %v89, %v541
    %v788 = vadd.f32 %v90, %v546
    %v789 = vadd.f32 %v91, %v549
    %v790 = vadd.f32 %v92, %v554
    %v791 = vadd.f32 %v93, %v557
    %v792 = vadd.f32 %v94, %v562
    %v793 = vadd.f32 %v95, %v565
    %v794 = vadd.f32 %v96, %v570
    %v795 = vadd.f32 %v97, %v573
    %v796 = vadd.f32 %v98, %v578
    %v797 = vadd.f32 %v99, %v581
    %v798 = vadd.f32 %v100, %v586
    %v799 = vadd.f32 %v101, %v589
    %v800 = vadd.f32 %v102, %v594
    %v801 = vadd.f32 %v103, %v597
    %v802 = vadd.f32 %v104, %v602
    %v803 = vadd.f32 %v105, %v605
    %v804 = vadd.f32 %v106, %v610
    %v805 = vadd.f32 %v107, %v613
    %v806 = vadd.f32 %v108, %v618
    %v807 = vadd.f32 %v109, %v621
    %v808 = vadd.f32 %v110, %v626
    %v809 = vadd.f32 %v111, %v629
    %v810 = vadd.f32 %v112, %v634
    %v811 = vadd.f32 %v113, %v637
    %v812 = vadd.f32 %v114, %v642
    %v813 = vadd.f32 %v115, %v645
    %v814 = vadd.f32 %v116, %v650
    %v815 = vadd.f32 %v117, %v653
    %v816 = vadd.f32 %v118, %v658
    %v817 = vadd.f32 %v119, %v661
    %v818 = vadd.f32 %v120, %v666
    %v819 = vadd.f32 %v121, %v669
    %v820 = vadd.f32 %v122, %v674
    %v821 = vadd.f32 %v123, %v677
    %v822 = vadd.f32 %v124, %v682
    %v823 = vadd.f32 %v125, %v685
    %v824 = vadd.f32 %v126, %v690
    %v825 = vadd.f32 %v127, %v693
    %v826 = vadd.f32 %v128, %v698
    %v827 = vadd.f32 %v129, %v701
    %v828 = vadd.f32 %v130, %v706
    %v829 = vadd.f32 %v131, %v709
    %v830 = vadd.f32 %v132, %v714
    %v831 = vadd.f32 %v133, %v717
    %v832 = vadd.f32 %v134, %v722
    %v833 = vadd.f32 %v135, %v725
    %v834 = vadd.f32 %v136, %v730
    %v835 = vadd.f32 %v137, %v733
    %v836 = vadd.f32 %v138, %v738
    %v837 = vadd.f32 %v139, %v741
    %v838 = vadd.f32 %v140, %v746
    %v839 = vadd.f32 %v141, %v749
    %v840 = vadd.f32 %v142, %v754
    %v841 = vadd.f32 %v143, %v757
    %v842 = vadd.f32 %v144, %v762
    %v843 = vadd.f32 %v145, %v765
    %v844 = vadd.f32 %v146, %v770
    %v845 = vadd.f32 %v147, %v773
    %v846 = vadd.f32 %v148, %v778
    %v847 = vadd.f32 %v149, %v781
    %vm848 = vcmask 64512
    %849 = vst.msk [vmem:[#allocation2] sm:$0xff] %vm848, %v784
    %850 = vst.msk [vmem:[#allocation2 + $0x8] sm:$0xff] %vm848, %v785
    %851 = vst.msk [vmem:[#allocation2 + $0x10] sm:$0xff] %vm848, %v786
    %852 = vst.msk [vmem:[#allocation2 + $0x18] sm:$0xff] %vm848, %v787
    %853 = vst.msk [vmem:[#allocation2 + $0x20] sm:$0xff] %vm848, %v788
    %854 = vst.msk [vmem:[#allocation2 + $0x28] sm:$0xff] %vm848, %v789
    %855 = vst.msk [vmem:[#allocation2 + $0x30] sm:$0xff] %vm848, %v790
    %856 = vst.msk [vmem:[#allocation2 + $0x38] sm:$0xff] %vm848, %v791
    %857 = vst.msk [vmem:[#allocation2 + $0x40] sm:$0xff] %vm848, %v792
    %858 = vst.msk [vmem:[#allocation2 + $0x48] sm:$0xff] %vm848, %v793
    %859 = vst.msk [vmem:[#allocation2 + $0x50] sm:$0xff] %vm848, %v794
    %860 = vst.msk [vmem:[#allocation2 + $0x58] sm:$0xff] %vm848, %v795
    %861 = vst.msk [vmem:[#allocation2 + $0x60] sm:$0xff] %vm848, %v796
    %862 = vst.msk [vmem:[#allocation2 + $0x68] sm:$0xff] %vm848, %v797
    %863 = vst.msk [vmem:[#allocation2 + $0x70] sm:$0xff] %vm848, %v798
    %864 = vst.msk [vmem:[#allocation2 + $0x78] sm:$0xff] %vm848, %v799
    %865 = vst.msk [vmem:[#allocation2 + $0x80] sm:$0xff] %vm848, %v800
    %866 = vst.msk [vmem:[#allocation2 + $0x88] sm:$0xff] %vm848, %v801
    %867 = vst.msk [vmem:[#allocation2 + $0x90] sm:$0xff] %vm848, %v802
    %868 = vst.msk [vmem:[#allocation2 + $0x98] sm:$0xff] %vm848, %v803
    %869 = vst.msk [vmem:[#allocation2 + $0xa0] sm:$0xff] %vm848, %v804
    %870 = vst.msk [vmem:[#allocation2 + $0xa8] sm:$0xff] %vm848, %v805
    %871 = vst.msk [vmem:[#allocation2 + $0xb0] sm:$0xff] %vm848, %v806
    %872 = vst.msk [vmem:[#allocation2 + $0xb8] sm:$0xff] %vm848, %v807
    %873 = vst.msk [vmem:[#allocation2 + $0xc0] sm:$0xff] %vm848, %v808
    %874 = vst.msk [vmem:[#allocation2 + $0xc8] sm:$0xff] %vm848, %v809
    %875 = vst.msk [vmem:[#allocation2 + $0xd0] sm:$0xff] %vm848, %v810
    %876 = vst.msk [vmem:[#allocation2 + $0xd8] sm:$0xff] %vm848, %v811
    %877 = vst.msk [vmem:[#allocation2 + $0xe0] sm:$0xff] %vm848, %v812
    %878 = vst.msk [vmem:[#allocation2 + $0xe8] sm:$0xff] %vm848, %v813
    %879 = vst.msk [vmem:[#allocation2 + $0xf0] sm:$0xff] %vm848, %v814
    %880 = vst.msk [vmem:[#allocation2 + $0xf8] sm:$0xff] %vm848, %v815
    %881 = vst.msk [vmem:[#allocation2 + $0x100] sm:$0xff] %vm848, %v816
    %882 = vst.msk [vmem:[#allocation2 + $0x108] sm:$0xff] %vm848, %v817
    %883 = vst.msk [vmem:[#allocation2 + $0x110] sm:$0xff] %vm848, %v818
    %884 = vst.msk [vmem:[#allocation2 + $0x118] sm:$0xff] %vm848, %v819
    %885 = vst.msk [vmem:[#allocation2 + $0x120] sm:$0xff] %vm848, %v820
    %886 = vst.msk [vmem:[#allocation2 + $0x128] sm:$0xff] %vm848, %v821
    %887 = vst.msk [vmem:[#allocation2 + $0x130] sm:$0xff] %vm848, %v822
    %888 = vst.msk [vmem:[#allocation2 + $0x138] sm:$0xff] %vm848, %v823
    %889 = vst.msk [vmem:[#allocation2 + $0x140] sm:$0xff] %vm848, %v824
    %890 = vst.msk [vmem:[#allocation2 + $0x148] sm:$0xff] %vm848, %v825
    %891 = vst.msk [vmem:[#allocation2 + $0x150] sm:$0xff] %vm848, %v826
    %892 = vst.msk [vmem:[#allocation2 + $0x158] sm:$0xff] %vm848, %v827
    %893 = vst.msk [vmem:[#allocation2 + $0x160] sm:$0xff] %vm848, %v828
    %894 = vst.msk [vmem:[#allocation2 + $0x168] sm:$0xff] %vm848, %v829
    %895 = vst.msk [vmem:[#allocation2 + $0x170] sm:$0xff] %vm848, %v830
    %896 = vst.msk [vmem:[#allocation2 + $0x178] sm:$0xff] %vm848, %v831
    %897 = vst.msk [vmem:[#allocation2 + $0x180] sm:$0xff] %vm848, %v832
    %898 = vst.msk [vmem:[#allocation2 + $0x188] sm:$0xff] %vm848, %v833
    %899 = vst.msk [vmem:[#allocation2 + $0x190] sm:$0xff] %vm848, %v834
    %900 = vst.msk [vmem:[#allocation2 + $0x198] sm:$0xff] %vm848, %v835
    %901 = vst.msk [vmem:[#allocation2 + $0x1a0] sm:$0xff] %vm848, %v836
    %902 = vst.msk [vmem:[#allocation2 + $0x1a8] sm:$0xff] %vm848, %v837
    %903 = vst.msk [vmem:[#allocation2 + $0x1b0] sm:$0xff] %vm848, %v838
    %904 = vst.msk [vmem:[#allocation2 + $0x1b8] sm:$0xff] %vm848, %v839
    %905 = vst.msk [vmem:[#allocation2 + $0x1c0] sm:$0xff] %vm848, %v840
    %906 = vst.msk [vmem:[#allocation2 + $0x1c8] sm:$0xff] %vm848, %v841
    %907 = vst.msk [vmem:[#allocation2 + $0x1d0] sm:$0xff] %vm848, %v842
    %908 = vst.msk [vmem:[#allocation2 + $0x1d8] sm:$0xff] %vm848, %v843
    %909 = vst.msk [vmem:[#allocation2 + $0x1e0] sm:$0xff] %vm848, %v844
    %910 = vst.msk [vmem:[#allocation2 + $0x1e8] sm:$0xff] %vm848, %v845
    %911 = vst.msk [vmem:[#allocation2 + $0x1f0] sm:$0xff] %vm848, %v846
    %912 = vst.msk [vmem:[#allocation2 + $0x1f8] sm:$0xff] %vm848, %v847
    // Predicated region
    $region14: #{tpu_custom_call.1} parent=1 // pred_check
      %p913 = pneg %p17
    $region15: #{tpu_custom_call.1} parent=1 // pred_check_branch
      %915 = sbr.rel (%p913) target = $region17
    $region16: #{tpu_custom_call.1} parent=1 // pred_region
      %v916 = vld [vmem:[#allocation2] sm:$0xff]
      %v917 = vld [vmem:[#allocation2 + $0x8] sm:$0xff]
      %v918 = vld [vmem:[#allocation2 + $0x10] sm:$0xff]
      %v919 = vld [vmem:[#allocation2 + $0x18] sm:$0xff]
      %v920 = vld [vmem:[#allocation2 + $0x20] sm:$0xff]
      %v921 = vld [vmem:[#allocation2 + $0x28] sm:$0xff]
      %v922 = vld [vmem:[#allocation2 + $0x30] sm:$0xff]
      %v923 = vld [vmem:[#allocation2 + $0x38] sm:$0xff]
      %v924 = vld [vmem:[#allocation2 + $0x40] sm:$0xff]
      %v925 = vld [vmem:[#allocation2 + $0x48] sm:$0xff]
      %v926 = vld [vmem:[#allocation2 + $0x50] sm:$0xff]
      %v927 = vld [vmem:[#allocation2 + $0x58] sm:$0xff]
      %v928 = vld [vmem:[#allocation2 + $0x60] sm:$0xff]
      %v929 = vld [vmem:[#allocation2 + $0x68] sm:$0xff]
      %v930 = vld [vmem:[#allocation2 + $0x70] sm:$0xff]
      %v931 = vld [vmem:[#allocation2 + $0x78] sm:$0xff]
      %v932 = vld [vmem:[#allocation2 + $0x80] sm:$0xff]
      %v933 = vld [vmem:[#allocation2 + $0x88] sm:$0xff]
      %v934 = vld [vmem:[#allocation2 + $0x90] sm:$0xff]
      %v935 = vld [vmem:[#allocation2 + $0x98] sm:$0xff]
      %v936 = vld [vmem:[#allocation2 + $0xa0] sm:$0xff]
      %v937 = vld [vmem:[#allocation2 + $0xa8] sm:$0xff]
      %v938 = vld [vmem:[#allocation2 + $0xb0] sm:$0xff]
      %v939 = vld [vmem:[#allocation2 + $0xb8] sm:$0xff]
      %v940 = vld [vmem:[#allocation2 + $0xc0] sm:$0xff]
      %v941 = vld [vmem:[#allocation2 + $0xc8] sm:$0xff]
      %v942 = vld [vmem:[#allocation2 + $0xd0] sm:$0xff]
      %v943 = vld [vmem:[#allocation2 + $0xd8] sm:$0xff]
      %v944 = vld [vmem:[#allocation2 + $0xe0] sm:$0xff]
      %v945 = vld [vmem:[#allocation2 + $0xe8] sm:$0xff]
      %v946 = vld [vmem:[#allocation2 + $0xf0] sm:$0xff]
      %v947 = vld [vmem:[#allocation2 + $0xf8] sm:$0xff]
      %v948 = vld [vmem:[#allocation2 + $0x100] sm:$0xff]
      %v949 = vld [vmem:[#allocation2 + $0x108] sm:$0xff]
      %v950 = vld [vmem:[#allocation2 + $0x110] sm:$0xff]
      %v951 = vld [vmem:[#allocation2 + $0x118] sm:$0xff]
      %v952 = vld [vmem:[#allocation2 + $0x120] sm:$0xff]
      %v953 = vld [vmem:[#allocation2 + $0x128] sm:$0xff]
      %v954 = vld [vmem:[#allocation2 + $0x130] sm:$0xff]
      %v955 = vld [vmem:[#allocation2 + $0x138] sm:$0xff]
      %v956 = vld [vmem:[#allocation2 + $0x140] sm:$0xff]
      %v957 = vld [vmem:[#allocation2 + $0x148] sm:$0xff]
      %v958 = vld [vmem:[#allocation2 + $0x150] sm:$0xff]
      %v959 = vld [vmem:[#allocation2 + $0x158] sm:$0xff]
      %v960 = vld [vmem:[#allocation2 + $0x160] sm:$0xff]
      %v961 = vld [vmem:[#allocation2 + $0x168] sm:$0xff]
      %v962 = vld [vmem:[#allocation2 + $0x170] sm:$0xff]
      %v963 = vld [vmem:[#allocation2 + $0x178] sm:$0xff]
      %v964 = vld [vmem:[#allocation2 + $0x180] sm:$0xff]
      %v965 = vld [vmem:[#allocation2 + $0x188] sm:$0xff]
      %v966 = vld [vmem:[#allocation2 + $0x190] sm:$0xff]
      %v967 = vld [vmem:[#allocation2 + $0x198] sm:$0xff]
      %v968 = vld [vmem:[#allocation2 + $0x1a0] sm:$0xff]
      %v969 = vld [vmem:[#allocation2 + $0x1a8] sm:$0xff]
      %v970 = vld [vmem:[#allocation2 + $0x1b0] sm:$0xff]
      %v971 = vld [vmem:[#allocation2 + $0x1b8] sm:$0xff]
      %v972 = vld [vmem:[#allocation2 + $0x1c0] sm:$0xff]
      %v973 = vld [vmem:[#allocation2 + $0x1c8] sm:$0xff]
      %v974 = vld [vmem:[#allocation2 + $0x1d0] sm:$0xff]
      %v975 = vld [vmem:[#allocation2 + $0x1d8] sm:$0xff]
      %v976 = vld [vmem:[#allocation2 + $0x1e0] sm:$0xff]
      %v977 = vld [vmem:[#allocation2 + $0x1e8] sm:$0xff]
      %v978 = vld [vmem:[#allocation2 + $0x1f0] sm:$0xff]
      %v979 = vld [vmem:[#allocation2 + $0x1f8] sm:$0xff]
      %980 = vst.msk [vmem:[%s2] sm:$0xff] %vm848, %v916
      %981 = vst.msk [vmem:[%s2 + $0x8] sm:$0xff] %vm848, %v917
      %982 = vst.msk [vmem:[%s2 + $0x10] sm:$0xff] %vm848, %v918
      %983 = vst.msk [vmem:[%s2 + $0x18] sm:$0xff] %vm848, %v919
      %984 = vst.msk [vmem:[%s2 + $0x20] sm:$0xff] %vm848, %v920
      %985 = vst.msk [vmem:[%s2 + $0x28] sm:$0xff] %vm848, %v921
      %986 = vst.msk [vmem:[%s2 + $0x30] sm:$0xff] %vm848, %v922
      %987 = vst.msk [vmem:[%s2 + $0x38] sm:$0xff] %vm848, %v923
      %988 = vst.msk [vmem:[%s2 + $0x40] sm:$0xff] %vm848, %v924
      %989 = vst.msk [vmem:[%s2 + $0x48] sm:$0xff] %vm848, %v925
      %990 = vst.msk [vmem:[%s2 + $0x50] sm:$0xff] %vm848, %v926
      %991 = vst.msk [vmem:[%s2 + $0x58] sm:$0xff] %vm848, %v927
      %992 = vst.msk [vmem:[%s2 + $0x60] sm:$0xff] %vm848, %v928
      %993 = vst.msk [vmem:[%s2 + $0x68] sm:$0xff] %vm848, %v929
      %994 = vst.msk [vmem:[%s2 + $0x70] sm:$0xff] %vm848, %v930
      %995 = vst.msk [vmem:[%s2 + $0x78] sm:$0xff] %vm848, %v931
      %996 = vst.msk [vmem:[%s2 + $0x80] sm:$0xff] %vm848, %v932
      %997 = vst.msk [vmem:[%s2 + $0x88] sm:$0xff] %vm848, %v933
      %998 = vst.msk [vmem:[%s2 + $0x90] sm:$0xff] %vm848, %v934
      %999 = vst.msk [vmem:[%s2 + $0x98] sm:$0xff] %vm848, %v935
      %1000 = vst.msk [vmem:[%s2 + $0xa0] sm:$0xff] %vm848, %v936
      %1001 = vst.msk [vmem:[%s2 + $0xa8] sm:$0xff] %vm848, %v937
      %1002 = vst.msk [vmem:[%s2 + $0xb0] sm:$0xff] %vm848, %v938
      %1003 = vst.msk [vmem:[%s2 + $0xb8] sm:$0xff] %vm848, %v939
      %1004 = vst.msk [vmem:[%s2 + $0xc0] sm:$0xff] %vm848, %v940
      %1005 = vst.msk [vmem:[%s2 + $0xc8] sm:$0xff] %vm848, %v941
      %1006 = vst.msk [vmem:[%s2 + $0xd0] sm:$0xff] %vm848, %v942
      %1007 = vst.msk [vmem:[%s2 + $0xd8] sm:$0xff] %vm848, %v943
      %1008 = vst.msk [vmem:[%s2 + $0xe0] sm:$0xff] %vm848, %v944
      %1009 = vst.msk [vmem:[%s2 + $0xe8] sm:$0xff] %vm848, %v945
      %1010 = vst.msk [vmem:[%s2 + $0xf0] sm:$0xff] %vm848, %v946
      %1011 = vst.msk [vmem:[%s2 + $0xf8] sm:$0xff] %vm848, %v947
      %1012 = vst.msk [vmem:[%s2 + $0x100] sm:$0xff] %vm848, %v948
      %1013 = vst.msk [vmem:[%s2 + $0x108] sm:$0xff] %vm848, %v949
      %1014 = vst.msk [vmem:[%s2 + $0x110] sm:$0xff] %vm848, %v950
      %1015 = vst.msk [vmem:[%s2 + $0x118] sm:$0xff] %vm848, %v951
      %1016 = vst.msk [vmem:[%s2 + $0x120] sm:$0xff] %vm848, %v952
      %1017 = vst.msk [vmem:[%s2 + $0x128] sm:$0xff] %vm848, %v953
      %1018 = vst.msk [vmem:[%s2 + $0x130] sm:$0xff] %vm848, %v954
      %1019 = vst.msk [vmem:[%s2 + $0x138] sm:$0xff] %vm848, %v955
      %1020 = vst.msk [vmem:[%s2 + $0x140] sm:$0xff] %vm848, %v956
      %1021 = vst.msk [vmem:[%s2 + $0x148] sm:$0xff] %vm848, %v957
      %1022 = vst.msk [vmem:[%s2 + $0x150] sm:$0xff] %vm848, %v958
      %1023 = vst.msk [vmem:[%s2 + $0x158] sm:$0xff] %vm848, %v959
      %1024 = vst.msk [vmem:[%s2 + $0x160] sm:$0xff] %vm848, %v960
      %1025 = vst.msk [vmem:[%s2 + $0x168] sm:$0xff] %vm848, %v961
      %1026 = vst.msk [vmem:[%s2 + $0x170] sm:$0xff] %vm848, %v962
      %1027 = vst.msk [vmem:[%s2 + $0x178] sm:$0xff] %vm848, %v963
      %1028 = vst.msk [vmem:[%s2 + $0x180] sm:$0xff] %vm848, %v964
      %1029 = vst.msk [vmem:[%s2 + $0x188] sm:$0xff] %vm848, %v965
      %1030 = vst.msk [vmem:[%s2 + $0x190] sm:$0xff] %vm848, %v966
      %1031 = vst.msk [vmem:[%s2 + $0x198] sm:$0xff] %vm848, %v967
      %1032 = vst.msk [vmem:[%s2 + $0x1a0] sm:$0xff] %vm848, %v968
      %1033 = vst.msk [vmem:[%s2 + $0x1a8] sm:$0xff] %vm848, %v969
      %1034 = vst.msk [vmem:[%s2 + $0x1b0] sm:$0xff] %vm848, %v970
      %1035 = vst.msk [vmem:[%s2 + $0x1b8] sm:$0xff] %vm848, %v971
      %1036 = vst.msk [vmem:[%s2 + $0x1c0] sm:$0xff] %vm848, %v972
      %1037 = vst.msk [vmem:[%s2 + $0x1c8] sm:$0xff] %vm848, %v973
      %1038 = vst.msk [vmem:[%s2 + $0x1d0] sm:$0xff] %vm848, %v974
      %1039 = vst.msk [vmem:[%s2 + $0x1d8] sm:$0xff] %vm848, %v975
      %1040 = vst.msk [vmem:[%s2 + $0x1e0] sm:$0xff] %vm848, %v976
      %1041 = vst.msk [vmem:[%s2 + $0x1e8] sm:$0xff] %vm848, %v977
      %1042 = vst.msk [vmem:[%s2 + $0x1f0] sm:$0xff] %vm848, %v978
      %1043 = vst.msk [vmem:[%s2 + $0x1f8] sm:$0xff] %vm848, %v979
      %v1044 = vsel %vm848, %v916, 0.0
      %v1045 = vsel %vm848, %v917, 0.0
      %v1046 = vadd.f32 %v1044, %v1045
      %v1047 = vsel %vm848, %v918, 0.0
      %v1048 = vadd.f32 %v1046, %v1047
      %v1049 = vsel %vm848, %v919, 0.0
      %v1050 = vadd.f32 %v1048, %v1049
      %v1051 = vsel %vm848, %v920, 0.0
      %v1052 = vadd.f32 %v1050, %v1051
      %v1053 = vsel %vm848, %v921, 0.0
      %v1054 = vadd.f32 %v1052, %v1053
      %v1055 = vsel %vm848, %v922, 0.0
      %v1056 = vadd.f32 %v1054, %v1055
      %v1057 = vsel %vm848, %v923, 0.0
      %v1058 = vadd.f32 %v1056, %v1057
      %v1059 = vsel %vm848, %v924, 0.0
      %v1060 = vadd.f32 %v1058, %v1059
      %v1061 = vsel %vm848, %v925, 0.0
      %v1062 = vadd.f32 %v1060, %v1061
      %v1063 = vsel %vm848, %v926, 0.0
      %v1064 = vadd.f32 %v1062, %v1063
      %v1065 = vsel %vm848, %v927, 0.0
      %v1066 = vadd.f32 %v1064, %v1065
      %v1067 = vsel %vm848, %v928, 0.0
      %v1068 = vadd.f32 %v1066, %v1067
      %v1069 = vsel %vm848, %v929, 0.0
      %v1070 = vadd.f32 %v1068, %v1069
      %v1071 = vsel %vm848, %v930, 0.0
      %v1072 = vadd.f32 %v1070, %v1071
      %v1073 = vsel %vm848, %v931, 0.0
      %v1074 = vadd.f32 %v1072, %v1073
      %v1075 = vsel %vm848, %v932, 0.0
      %v1076 = vadd.f32 %v1074, %v1075
      %v1077 = vsel %vm848, %v933, 0.0
      %v1078 = vadd.f32 %v1076, %v1077
      %v1079 = vsel %vm848, %v934, 0.0
      %v1080 = vadd.f32 %v1078, %v1079
      %v1081 = vsel %vm848, %v935, 0.0
      %v1082 = vadd.f32 %v1080, %v1081
      %v1083 = vsel %vm848, %v936, 0.0
      %v1084 = vadd.f32 %v1082, %v1083
      %v1085 = vsel %vm848, %v937, 0.0
      %v1086 = vadd.f32 %v1084, %v1085
      %v1087 = vsel %vm848, %v938, 0.0
      %v1088 = vadd.f32 %v1086, %v1087
      %v1089 = vsel %vm848, %v939, 0.0
      %v1090 = vadd.f32 %v1088, %v1089
      %v1091 = vsel %vm848, %v940, 0.0
      %v1092 = vadd.f32 %v1090, %v1091
      %v1093 = vsel %vm848, %v941, 0.0
      %v1094 = vadd.f32 %v1092, %v1093
      %v1095 = vsel %vm848, %v942, 0.0
      %v1096 = vadd.f32 %v1094, %v1095
      %v1097 = vsel %vm848, %v943, 0.0
      %v1098 = vadd.f32 %v1096, %v1097
      %v1099 = vsel %vm848, %v944, 0.0
      %v1100 = vadd.f32 %v1098, %v1099
      %v1101 = vsel %vm848, %v945, 0.0
      %v1102 = vadd.f32 %v1100, %v1101
      %v1103 = vsel %vm848, %v946, 0.0
      %v1104 = vadd.f32 %v1102, %v1103
      %v1105 = vsel %vm848, %v947, 0.0
      %v1106 = vadd.f32 %v1104, %v1105
      %v1107 = vsel %vm848, %v948, 0.0
      %v1108 = vadd.f32 %v1106, %v1107
      %v1109 = vsel %vm848, %v949, 0.0
      %v1110 = vadd.f32 %v1108, %v1109
      %v1111 = vsel %vm848, %v950, 0.0
      %v1112 = vadd.f32 %v1110, %v1111
      %v1113 = vsel %vm848, %v951, 0.0
      %v1114 = vadd.f32 %v1112, %v1113
      %v1115 = vsel %vm848, %v952, 0.0
      %v1116 = vadd.f32 %v1114, %v1115
      %v1117 = vsel %vm848, %v953, 0.0
      %v1118 = vadd.f32 %v1116, %v1117
      %v1119 = vsel %vm848, %v954, 0.0
      %v1120 = vadd.f32 %v1118, %v1119
      %v1121 = vsel %vm848, %v955, 0.0
      %v1122 = vadd.f32 %v1120, %v1121
      %v1123 = vsel %vm848, %v956, 0.0
      %v1124 = vadd.f32 %v1122, %v1123
      %v1125 = vsel %vm848, %v957, 0.0
      %v1126 = vadd.f32 %v1124, %v1125
      %v1127 = vsel %vm848, %v958, 0.0
      %v1128 = vadd.f32 %v1126, %v1127
      %v1129 = vsel %vm848, %v959, 0.0
      %v1130 = vadd.f32 %v1128, %v1129
      %v1131 = vsel %vm848, %v960, 0.0
      %v1132 = vadd.f32 %v1130, %v1131
      %v1133 = vsel %vm848, %v961, 0.0
      %v1134 = vadd.f32 %v1132, %v1133
      %v1135 = vsel %vm848, %v962, 0.0
      %v1136 = vadd.f32 %v1134, %v1135
      %v1137 = vsel %vm848, %v963, 0.0
      %v1138 = vadd.f32 %v1136, %v1137
      %v1139 = vsel %vm848, %v964, 0.0
      %v1140 = vadd.f32 %v1138, %v1139
      %v1141 = vsel %vm848, %v965, 0.0
      %v1142 = vadd.f32 %v1140, %v1141
      %v1143 = vsel %vm848, %v966, 0.0
      %v1144 = vadd.f32 %v1142, %v1143
      %v1145 = vsel %vm848, %v967, 0.0
      %v1146 = vadd.f32 %v1144, %v1145
      %v1147 = vsel %vm848, %v968, 0.0
      %v1148 = vadd.f32 %v1146, %v1147
      %v1149 = vsel %vm848, %v969, 0.0
      %v1150 = vadd.f32 %v1148, %v1149
      %v1151 = vsel %vm848, %v970, 0.0
      %v1152 = vadd.f32 %v1150, %v1151
      %v1153 = vsel %vm848, %v971, 0.0
      %v1154 = vadd.f32 %v1152, %v1153
      %v1155 = vsel %vm848, %v972, 0.0
      %v1156 = vadd.f32 %v1154, %v1155
      %v1157 = vsel %vm848, %v973, 0.0
      %v1158 = vadd.f32 %v1156, %v1157
      %v1159 = vsel %vm848, %v974, 0.0
      %v1160 = vadd.f32 %v1158, %v1159
      %v1161 = vsel %vm848, %v975, 0.0
      %v1162 = vadd.f32 %v1160, %v1161
      %v1163 = vsel %vm848, %v976, 0.0
      %v1164 = vadd.f32 %v1162, %v1163
      %v1165 = vsel %vm848, %v977, 0.0
      %v1166 = vadd.f32 %v1164, %v1165
      %v1167 = vsel %vm848, %v978, 0.0
      %v1168 = vadd.f32 %v1166, %v1167
      %v1169 = vsel %vm848, %v979, 0.0
      %v1170 = vadd.f32 %v1168, %v1169
      %v1171 = vrot.slane %v1170, 4
      %v1172 = vadd.f32 %v1170, %v1171
      %v1173 = vrot.slane %v1172, 2
      %v1174 = vadd.f32 %v1172, %v1173
      %v1175 = vrot.slane %v1174, 1
      %v1176 = vadd.f32 %v1174, %v1175
      %vm1177 = vcmask 57344
      %1178 = vst.msk [vmem:[#allocation3] sm:$0x1] %vm1177, %v1176
      %v1179 = vmul.f32 %v916, %v916
      %v1180 = vmul.f32 %v917, %v917
      %v1181 = vmul.f32 %v918, %v918
      %v1182 = vmul.f32 %v919, %v919
      %v1183 = vmul.f32 %v920, %v920
      %v1184 = vmul.f32 %v921, %v921
      %v1185 = vmul.f32 %v922, %v922
      %v1186 = vmul.f32 %v923, %v923
      %v1187 = vmul.f32 %v924, %v924
      %v1188 = vmul.f32 %v925, %v925
      %v1189 = vmul.f32 %v926, %v926
      %v1190 = vmul.f32 %v927, %v927
      %v1191 = vmul.f32 %v928, %v928
      %v1192 = vmul.f32 %v929, %v929
      %v1193 = vmul.f32 %v930, %v930
      %v1194 = vmul.f32 %v931, %v931
      %v1195 = vmul.f32 %v932, %v932
      %v1196 = vmul.f32 %v933, %v933
      %v1197 = vmul.f32 %v934, %v934
      %v1198 = vmul.f32 %v935, %v935
      %v1199 = vmul.f32 %v936, %v936
      %v1200 = vmul.f32 %v937, %v937
      %v1201 = vmul.f32 %v938, %v938
      %v1202 = vmul.f32 %v939, %v939
      %v1203 = vmul.f32 %v940, %v940
      %v1204 = vmul.f32 %v941, %v941
      %v1205 = vmul.f32 %v942, %v942
      %v1206 = vmul.f32 %v943, %v943
      %v1207 = vmul.f32 %v944, %v944
      %v1208 = vmul.f32 %v945, %v945
      %v1209 = vmul.f32 %v946, %v946
      %v1210 = vmul.f32 %v947, %v947
      %v1211 = vmul.f32 %v948, %v948
      %v1212 = vmul.f32 %v949, %v949
      %v1213 = vmul.f32 %v950, %v950
      %v1214 = vmul.f32 %v951, %v951
      %v1215 = vmul.f32 %v952, %v952
      %v1216 = vmul.f32 %v953, %v953
      %v1217 = vmul.f32 %v954, %v954
      %v1218 = vmul.f32 %v955, %v955
      %v1219 = vmul.f32 %v956, %v956
      %v1220 = vmul.f32 %v957, %v957
      %v1221 = vmul.f32 %v958, %v958
      %v1222 = vmul.f32 %v959, %v959
      %v1223 = vmul.f32 %v960, %v960
      %v1224 = vmul.f32 %v961, %v961
      %v1225 = vmul.f32 %v962, %v962
      %v1226 = vmul.f32 %v963, %v963
      %v1227 = vmul.f32 %v964, %v964
      %v1228 = vmul.f32 %v965, %v965
      %v1229 = vmul.f32 %v966, %v966
      %v1230 = vmul.f32 %v967, %v967
      %v1231 = vmul.f32 %v968, %v968
      %v1232 = vmul.f32 %v969, %v969
      %v1233 = vmul.f32 %v970, %v970
      %v1234 = vmul.f32 %v971, %v971
      %v1235 = vmul.f32 %v972, %v972
      %v1236 = vmul.f32 %v973, %v973
      %v1237 = vmul.f32 %v974, %v974
      %v1238 = vmul.f32 %v975, %v975
      %v1239 = vmul.f32 %v976, %v976
      %v1240 = vmul.f32 %v977, %v977
      %v1241 = vmul.f32 %v978, %v978
      %v1242 = vmul.f32 %v979, %v979
      %v1243 = vsel %vm848, %v1179, 0.0
      %v1244 = vsel %vm848, %v1180, 0.0
      %v1245 = vadd.f32 %v1243, %v1244
      %v1246 = vsel %vm848, %v1181, 0.0
      %v1247 = vadd.f32 %v1245, %v1246
      %v1248 = vsel %vm848, %v1182, 0.0
      %v1249 = vadd.f32 %v1247, %v1248
      %v1250 = vsel %vm848, %v1183, 0.0
      %v1251 = vadd.f32 %v1249, %v1250
      %v1252 = vsel %vm848, %v1184, 0.0
      %v1253 = vadd.f32 %v1251, %v1252
      %v1254 = vsel %vm848, %v1185, 0.0
      %v1255 = vadd.f32 %v1253, %v1254
      %v1256 = vsel %vm848, %v1186, 0.0
      %v1257 = vadd.f32 %v1255, %v1256
      %v1258 = vsel %vm848, %v1187, 0.0
      %v1259 = vadd.f32 %v1257, %v1258
      %v1260 = vsel %vm848, %v1188, 0.0
      %v1261 = vadd.f32 %v1259, %v1260
      %v1262 = vsel %vm848, %v1189, 0.0
      %v1263 = vadd.f32 %v1261, %v1262
      %v1264 = vsel %vm848, %v1190, 0.0
      %v1265 = vadd.f32 %v1263, %v1264
      %v1266 = vsel %vm848, %v1191, 0.0
      %v1267 = vadd.f32 %v1265, %v1266
      %v1268 = vsel %vm848, %v1192, 0.0
      %v1269 = vadd.f32 %v1267, %v1268
      %v1270 = vsel %vm848, %v1193, 0.0
      %v1271 = vadd.f32 %v1269, %v1270
      %v1272 = vsel %vm848, %v1194, 0.0
      %v1273 = vadd.f32 %v1271, %v1272
      %v1274 = vsel %vm848, %v1195, 0.0
      %v1275 = vadd.f32 %v1273, %v1274
      %v1276 = vsel %vm848, %v1196, 0.0
      %v1277 = vadd.f32 %v1275, %v1276
      %v1278 = vsel %vm848, %v1197, 0.0
      %v1279 = vadd.f32 %v1277, %v1278
      %v1280 = vsel %vm848, %v1198, 0.0
      %v1281 = vadd.f32 %v1279, %v1280
      %v1282 = vsel %vm848, %v1199, 0.0
      %v1283 = vadd.f32 %v1281, %v1282
      %v1284 = vsel %vm848, %v1200, 0.0
      %v1285 = vadd.f32 %v1283, %v1284
      %v1286 = vsel %vm848, %v1201, 0.0
      %v1287 = vadd.f32 %v1285, %v1286
      %v1288 = vsel %vm848, %v1202, 0.0
      %v1289 = vadd.f32 %v1287, %v1288
      %v1290 = vsel %vm848, %v1203, 0.0
      %v1291 = vadd.f32 %v1289, %v1290
      %v1292 = vsel %vm848, %v1204, 0.0
      %v1293 = vadd.f32 %v1291, %v1292
      %v1294 = vsel %vm848, %v1205, 0.0
      %v1295 = vadd.f32 %v1293, %v1294
      %v1296 = vsel %vm848, %v1206, 0.0
      %v1297 = vadd.f32 %v1295, %v1296
      %v1298 = vsel %vm848, %v1207, 0.0
      %v1299 = vadd.f32 %v1297, %v1298
      %v1300 = vsel %vm848, %v1208, 0.0
      %v1301 = vadd.f32 %v1299, %v1300
      %v1302 = vsel %vm848, %v1209, 0.0
      %v1303 = vadd.f32 %v1301, %v1302
      %v1304 = vsel %vm848, %v1210, 0.0
      %v1305 = vadd.f32 %v1303, %v1304
      %v1306 = vsel %vm848, %v1211, 0.0
      %v1307 = vadd.f32 %v1305, %v1306
      %v1308 = vsel %vm848, %v1212, 0.0
      %v1309 = vadd.f32 %v1307, %v1308
      %v1310 = vsel %vm848, %v1213, 0.0
      %v1311 = vadd.f32 %v1309, %v1310
      %v1312 = vsel %vm848, %v1214, 0.0
      %v1313 = vadd.f32 %v1311, %v1312
      %v1314 = vsel %vm848, %v1215, 0.0
      %v1315 = vadd.f32 %v1313, %v1314
      %v1316 = vsel %vm848, %v1216, 0.0
      %v1317 = vadd.f32 %v1315, %v1316
      %v1318 = vsel %vm848, %v1217, 0.0
      %v1319 = vadd.f32 %v1317, %v1318
      %v1320 = vsel %vm848, %v1218, 0.0
      %v1321 = vadd.f32 %v1319, %v1320
      %v1322 = vsel %vm848, %v1219, 0.0
      %v1323 = vadd.f32 %v1321, %v1322
      %v1324 = vsel %vm848, %v1220, 0.0
      %v1325 = vadd.f32 %v1323, %v1324
      %v1326 = vsel %vm848, %v1221, 0.0
      %v1327 = vadd.f32 %v1325, %v1326
      %v1328 = vsel %vm848, %v1222, 0.0
      %v1329 = vadd.f32 %v1327, %v1328
      %v1330 = vsel %vm848, %v1223, 0.0
      %v1331 = vadd.f32 %v1329, %v1330
      %v1332 = vsel %vm848, %v1224, 0.0
      %v1333 = vadd.f32 %v1331, %v1332
      %v1334 = vsel %vm848, %v1225, 0.0
      %v1335 = vadd.f32 %v1333, %v1334
      %v1336 = vsel %vm848, %v1226, 0.0
      %v1337 = vadd.f32 %v1335, %v1336
      %v1338 = vsel %vm848, %v1227, 0.0
      %v1339 = vadd.f32 %v1337, %v1338
      %v1340 = vsel %vm848, %v1228, 0.0
      %v1341 = vadd.f32 %v1339, %v1340
      %v1342 = vsel %vm848, %v1229, 0.0
      %v1343 = vadd.f32 %v1341, %v1342
      %v1344 = vsel %vm848, %v1230, 0.0
      %v1345 = vadd.f32 %v1343, %v1344
      %v1346 = vsel %vm848, %v1231, 0.0
      %v1347 = vadd.f32 %v1345, %v1346
      %v1348 = vsel %vm848, %v1232, 0.0
      %v1349 = vadd.f32 %v1347, %v1348
      %v1350 = vsel %vm848, %v1233, 0.0
      %v1351 = vadd.f32 %v1349, %v1350
      %v1352 = vsel %vm848, %v1234, 0.0
      %v1353 = vadd.f32 %v1351, %v1352
      %v1354 = vsel %vm848, %v1235, 0.0
      %v1355 = vadd.f32 %v1353, %v1354
      %v1356 = vsel %vm848, %v1236, 0.0
      %v1357 = vadd.f32 %v1355, %v1356
      %v1358 = vsel %vm848, %v1237, 0.0
      %v1359 = vadd.f32 %v1357, %v1358
      %v1360 = vsel %vm848, %v1238, 0.0
      %v1361 = vadd.f32 %v1359, %v1360
      %v1362 = vsel %vm848, %v1239, 0.0
      %v1363 = vadd.f32 %v1361, %v1362
      %v1364 = vsel %vm848, %v1240, 0.0
      %v1365 = vadd.f32 %v1363, %v1364
      %v1366 = vsel %vm848, %v1241, 0.0
      %v1367 = vadd.f32 %v1365, %v1366
      %v1368 = vsel %vm848, %v1242, 0.0
      %v1369 = vadd.f32 %v1367, %v1368
      %v1370 = vrot.slane %v1369, 4
      %v1371 = vadd.f32 %v1369, %v1370
      %v1372 = vrot.slane %v1371, 2
      %v1373 = vadd.f32 %v1371, %v1372
      %v1374 = vrot.slane %v1373, 1
      %v1375 = vadd.f32 %v1373, %v1374
      %1376 = vst.msk [vmem:[#allocation5] sm:$0x1] %vm1177, %v1375
    $region17: #{tpu_custom_call.1} parent=1 // pred_fallthru
      _
    // Predicated region
    $region18: #{tpu_custom_call.1} parent=1 // pred_check
      _
    $region19: #{tpu_custom_call.1} parent=1 // pred_check_branch
      %1378 = sbr.rel (0) target = $region21
    $region20: #{tpu_custom_call.1} parent=1 // pred_region
      _
    $region21: #{tpu_custom_call.1} parent=1 // pred_fallthru
      _
    // Predicated region
    $region22: #{tpu_custom_call.1} parent=1 // pred_check
      _
    $region23: #{tpu_custom_call.1} parent=1 // pred_check_branch
      %1380 = sbr.rel (0) target = $region25
    $region24: #{tpu_custom_call.1} parent=1 // pred_region
      %s1382 = ssub.s32 16, 16
      %1383 = vsyncadd [#allocation4], %s1382
      %s1385 = sshll.u32 [#allocation3], 4
      %s1386 = int_to_ptr.vmem [resolvable:$true] %s1385
      %1388 = dma.vmem_to_hbm [thread:$0]  %s1386, 16, %s3, [#allocation4]
    $region25: #{tpu_custom_call.1} parent=1 // pred_fallthru
      _
    // Predicated region
    $region26: #{tpu_custom_call.1} parent=1 // pred_check
      _
    $region27: #{tpu_custom_call.1} parent=1 // pred_check_branch
      %1390 = sbr.rel (0) target = $region29
    $region28: #{tpu_custom_call.1} parent=1 // pred_region
      %s1392 = ssub.s32 16, 16
      %1393 = vsyncadd [#allocation6], %s1392
      %s1395 = sshll.u32 [#allocation5], 4
      %s1396 = int_to_ptr.vmem [resolvable:$true] %s1395
      %1398 = dma.vmem_to_hbm [thread:$0]  %s1396, 16, %s4, [#allocation6]
    $region29: #{tpu_custom_call.1} parent=1 // pred_fallthru
      _
    // Predicated region
    $region30: #{tpu_custom_call.1} parent=1 // pred_check
      _
    $region31: #{tpu_custom_call.1} parent=1 // pred_check_branch
      %1400 = sbr.rel (0) target = $region33
    $region32: #{tpu_custom_call.1} parent=1 // pred_region
      _
    $region33: #{tpu_custom_call.1} parent=1 // pred_fallthru
      _
    // Predicated region
    $region34: #{tpu_custom_call.1} parent=1 // pred_check
      _
    $region35: #{tpu_custom_call.1} parent=1 // pred_check_branch
      %1402 = sbr.rel (0) target = $region37
    $region36: #{tpu_custom_call.1} parent=1 // pred_region
      %1403 = dma.done [#allocation4], 16
    $region37: #{tpu_custom_call.1} parent=1 // pred_fallthru
      _
    // Predicated region
    $region38: #{tpu_custom_call.1} parent=1 // pred_check
      _
    $region39: #{tpu_custom_call.1} parent=1 // pred_check_branch
      %1405 = sbr.rel (0) target = $region41
    $region40: #{tpu_custom_call.1} parent=1 // pred_region
      %1406 = dma.done [#allocation6], 16
    $region41: #{tpu_custom_call.1} parent=1 // pred_fallthru
      _
    %1407 = vsyncpa [#allocation4], 1
    %1408 = vsyncpa [#allocation6], 1

</llo_original>
